<compile_context>
chip_gen: v7x
topology: tpu7x:2x2x1
jax: 0.10.0
libtpu: 0.0.40
codegen_flags: <defaults>
</compile_context>

<pallas_src>
import functools

import jax
import jax.numpy as jnp
from jax import lax
from jax.experimental import pallas as pl
from jax.experimental.pallas import tpu as pltpu


def _round_up(v, m):
    return ((v + m - 1) // m) * m


# ----------------------------- Pallas kernel --------------------------------

def _ecgn_fused_kernel(x0_hbm, row_ref, col_ref, scale_ref, pseudo_ref,
                       wnn_ref, bnn_ref, wroot_ref, bias_ref,
                       rexp_ref, rred_ref,
                       out_ref, xcur_ref, acc_ref, dma_sem,
                       *, n_layers, drop_act, sel_dtype):
    l = pl.program_id(0)          # layer index  (sequential: carries xcur state)
    e = pl.program_id(1)          # edge-tile index (reduction into acc)
    n_e = pl.num_programs(1)

    # layer 0 / tile 0: DMA the (padded) input node features into the resident
    # VMEM buffer once (x0 stays in HBM; no double-buffered input block for it).
    @pl.when(jnp.logical_and(l == 0, e == 0))
    def _():
        cp = pltpu.make_async_copy(x0_hbm, xcur_ref, dma_sem)
        cp.start()
        cp.wait()

    # per layer: reset the mean-aggregation accumulator
    @pl.when(e == 0)
    def _():
        acc_ref[...] = jnp.zeros_like(acc_ref)

    n_pad = xcur_ref.shape[0]
    one = jnp.array(1, sel_dtype)
    zero = jnp.array(0, sel_dtype)

    # ---- edge network: Linear(3 -> Fin*Fout) with folded eval-BN, then ReLU ----
    # K=3 contraction on the VPU as 3 broadcast multiply-adds (MXU stays free).
    pseudo = pseudo_ref[...]                                   # [Et, 3]
    wnn = wnn_ref[0]                                           # [3, FF]
    w_edge = (bnn_ref[0]
              + pseudo[:, 0:1] * wnn[0:1, :]
              + pseudo[:, 1:2] * wnn[1:2, :]
              + pseudo[:, 2:3] * wnn[2:3, :])
    w_edge = jnp.maximum(w_edge, 0.0)                          # [Et, FF] f32

    # ---- gather x[row] for this edge tile: {0,1} selector built in-register ----
    node_row = lax.broadcasted_iota(jnp.int32, (1, n_pad), 1)  # [1, Npad]
    gsel = jnp.where(row_ref[...] == node_row, one, zero)      # [Et, Npad]  (sel_dtype)
    x = xcur_ref[...].astype(sel_dtype)                        # [Npad, F]
    x_src = jnp.dot(gsel, x, preferred_element_type=jnp.float32)          # [Et, F] f32

    # ---- per-edge message, lane-aligned two-matmul form (FF lanes on the MXU) ----
    x_exp = jnp.dot(x_src.astype(sel_dtype), rexp_ref[...],
                    preferred_element_type=jnp.float32)                   # [Et, FF]
    msg = jnp.dot((x_exp * w_edge).astype(sel_dtype), rred_ref[...],
                  preferred_element_type=jnp.float32)                     # [Et, F]
    # mean-aggregation: 1/deg applied per edge (0 for padded edges) on the VPU,
    # keeping the scatter selector a pure {0,1} mask (exact in bf16).
    msg = msg * scale_ref[...]                                            # [Et, F]

    # ---- scatter onto target nodes ----
    node_col = lax.broadcasted_iota(jnp.int32, (n_pad, 1), 0)  # [Npad, 1]
    ssel = jnp.where(node_col == col_ref[...], one, zero)      # [Npad, Et] (sel_dtype)
    acc_ref[...] += jnp.dot(ssel, msg.astype(sel_dtype),
                            preferred_element_type=jnp.float32)

    # ---- finalize this layer on the last edge tile ----
    def _finish(apply_relu):
        x_in = xcur_ref[...]
        out = (acc_ref[...]
               + jnp.dot(x_in.astype(sel_dtype), wroot_ref[0].astype(sel_dtype),
                         preferred_element_type=jnp.float32)
               + bias_ref[0])
        if apply_relu:
            out = jnp.maximum(out, 0.0)
        xcur_ref[...] = out                    # next layer's input (stays in VMEM)

        # only the last layer writes the output block (intermediate stores dropped)
        @pl.when(l == n_layers - 1)
        def _():
            out_ref[...] = out.astype(out_ref.dtype)

    if drop_act:
        @pl.when(jnp.logical_and(e == n_e - 1, l < n_layers - 1))
        def _():
            _finish(True)

        @pl.when(jnp.logical_and(e == n_e - 1, l == n_layers - 1))
        def _():
            _finish(False)
    else:
        @pl.when(e == n_e - 1)
        def _():
            _finish(True)


# ----------------------------- module forward --------------------------------

def ecgn_sa_forward(packed, x, pos, batch, idx, edge_index, *,
                    patch_size=None, drop_act=False, edge_tile=256,
                    mxu_dtype=jnp.float32):
    n_layers = packed['n_layers']
    fmax = packed['fmax']
    ff = fmax * fmax
    out_ch = packed['out_ch']

    row = edge_index[0].astype(jnp.int32)
    col = edge_index[1].astype(jnp.int32)
    n = x.shape[0]
    e = int(row.shape[0])

    pseudo = (pos[col] - pos[row]).astype(jnp.float32)
    if patch_size is not None:
        pseudo = jnp.clip(pseudo / patch_size + 0.5, 0.0, 1.0)

    # per-edge mean-aggregation scale 1 / max(indeg(col_e), 1)
    deg = jax.ops.segment_sum(jnp.ones((e,), jnp.float32), col, num_segments=n)
    inv_deg_e = (1.0 / jnp.clip(deg, 1.0, None))[col]

    # padding: lane-aligned edge tiles, lane-aligned node count
    edge_tile = max(128, (edge_tile // 128) * 128)
    # cap the edge tile so the [Et, FF] f32 intermediates stay under ~4 MiB each
    et_budget = max(128, ((4 * 1024 * 1024) // (ff * 4)) // 128 * 128)
    et = min(edge_tile, et_budget)
    et = max(128, min(et, _round_up(max(e, 1), 128)))
    e_pad = max(_round_up(e, et), et)          # >= one tile even for E == 0
    n_pad = _round_up(n, 128)

    row_p = jnp.zeros((e_pad, 1), jnp.int32).at[:e, 0].set(row)
    col_p = jnp.zeros((1, e_pad), jnp.int32).at[0, :e].set(col)
    scale_p = jnp.zeros((e_pad, 1), jnp.float32).at[:e, 0].set(inv_deg_e)
    pseudo_p = jnp.zeros((e_pad, 3), jnp.float32).at[:e].set(pseudo)
    x_p = jnp.zeros((n_pad, fmax), jnp.float32).at[:n, :x.shape[1]].set(
        x.astype(jnp.float32))

    sel_dtype = mxu_dtype
    rexp = packed['rexp'].astype(sel_dtype)    # 0/1 -> exact in bf16
    rred = packed['rred'].astype(sel_dtype)

    grid = (n_layers, e_pad // et)
    kernel = functools.partial(_ecgn_fused_kernel,
                               n_layers=n_layers, drop_act=drop_act,
                               sel_dtype=sel_dtype)

    flops = n_layers * (4 * e_pad * n_pad * fmax       # gather + scatter matmuls
                        + 4 * e_pad * ff * fmax        # expand + reduce matmuls
                        + 2 * n_pad * fmax * fmax      # root matmul
                        + 10 * e_pad * ff)             # edge MLP + elementwise
    bytes_accessed = 4 * (2 * n_pad * fmax
                          + n_layers * (6 * e_pad + 4 * ff + fmax * fmax + fmax)
                          + 2 * fmax * ff)

    # explicit VMEM budget (v7x: 64 MiB physical / 32 MiB scoped default)
    sel_bpe = 2 if sel_dtype == jnp.bfloat16 else 4
    per_step_vmem = (
        3 * n_pad * fmax * 4                       # xcur, acc scratch + resident out block
        + 2 * et * 6 * 4                           # double-buffered per-tile edge inputs
        + 2 * (4 * ff + fmax * fmax + fmax) * 4    # per-layer weight blocks (x2 buffers)
        + 2 * 2 * fmax * ff * sel_bpe              # rexp / rred
        + 2 * et * n_pad * sel_bpe                 # gsel / ssel
        + 2 * et * ff * 4                          # w_edge / x_exp
        + 2 * et * fmax * 4                        # x_src / msg
    )
    vmem_limit = int(min(max(2 * per_step_vmem, 32 * 1024 * 1024),
                         60 * 1024 * 1024))

    out = pl.pallas_call(
        kernel,
        out_shape=jax.ShapeDtypeStruct((n_pad, fmax), jnp.float32),
        grid_spec=pltpu.PrefetchScalarGridSpec(
            num_scalar_prefetch=0,
            grid=grid,
            in_specs=[
                pl.BlockSpec(memory_space=pl.ANY),                       # x0 (HBM, DMA'd once)
                pl.BlockSpec((et, 1), lambda l, t: (t, 0)),              # row indices
                pl.BlockSpec((1, et), lambda l, t: (0, t)),              # col indices (T)
                pl.BlockSpec((et, 1), lambda l, t: (t, 0)),              # 1/deg per edge
                pl.BlockSpec((et, 3), lambda l, t: (t, 0)),              # pseudo
                pl.BlockSpec((1, 3, ff), lambda l, t: (l, 0, 0)),        # edge-MLP W (BN folded)
                pl.BlockSpec((1, 1, ff), lambda l, t: (l, 0, 0)),        # edge-MLP b (BN folded)
                pl.BlockSpec((1, fmax, fmax), lambda l, t: (l, 0, 0)),   # W_root
                pl.BlockSpec((1, 1, fmax), lambda l, t: (l, 0, 0)),      # bias
                pl.BlockSpec((fmax, ff), lambda l, t: (0, 0)),           # R_expand
                pl.BlockSpec((ff, fmax), lambda l, t: (0, 0)),           # R_reduce
            ],
            out_specs=pl.BlockSpec((n_pad, fmax), lambda l, t: (0, 0)),
            scratch_shapes=[pltpu.VMEM((n_pad, fmax), jnp.float32),      # running x
                            pltpu.VMEM((n_pad, fmax), jnp.float32),      # aggregation acc
                            pltpu.SemaphoreType.DMA(())],                # x0 copy sem
        ),
        compiler_params=pltpu.CompilerParams(
            dimension_semantics=("arbitrary", "arbitrary"),
            vmem_limit_bytes=vmem_limit,
        ),
        cost_estimate=pl.CostEstimate(flops=flops, transcendentals=0,
                                      bytes_accessed=bytes_accessed),
    )(x_p, row_p, col_p, scale_p, pseudo_p,
      packed['wnn'], packed['bnn'], packed['wroot'], packed['bias'],
      rexp, rred)

    x_out = out[:n, :out_ch]
    if idx is not None:
        return x_out[idx], pos[idx], batch[idx]
    return x_out, pos, batch


# ----------------------------- parameters ------------------------------------

def init_params(key, in_ch, hid_ch, out_ch, n_layers=3):
    dims = []
    for i in range(n_layers):
        fi = in_ch if i == 0 else hid_ch
        fo = out_ch if i == n_layers - 1 else hid_ch
        dims.append((fi, fo))

    layers = []
    eps = 1e-5
    for i, (fi, fo) in enumerate(dims):
        k = jax.random.fold_in(key, i)
        k1, k2, k3, k4, k5, k6 = jax.random.split(k, 6)
        wnn = jax.random.normal(k1, (3, fi * fo), jnp.float32) * 0.3
        bnn = jax.random.normal(k2, (1, fi * fo), jnp.float32) * 0.1
        gamma = 1.0 + 0.1 * jax.random.normal(k3, (1, fi * fo), jnp.float32)
        beta = 0.1 * jax.random.normal(k4, (1, fi * fo), jnp.float32)
        # fold eval-mode BatchNorm1d (running_mean=0, running_var=1) into the Linear
        a = gamma / jnp.sqrt(1.0 + eps)
        wnn_eff = wnn * a
        bnn_eff = bnn * a + beta
        wroot = jax.random.normal(k5, (fi, fo), jnp.float32) / jnp.sqrt(float(fi))
        bias = 0.1 * jax.random.normal(k6, (1, fo), jnp.float32)
        layers.append(dict(wnn_eff=wnn_eff, bnn_eff=bnn_eff,
                           wroot=wroot, bias=bias))
    return layers


def pack_params(layers):
    """Pad per-layer weights to a common Fmax and stack them for the fused kernel."""
    n_layers = len(layers)
    fmax = max(max(p['wroot'].shape) for p in layers)
    fmax = _round_up(fmax, 8)
    ff = fmax * fmax

    wnn = jnp.zeros((n_layers, 3, ff), jnp.float32)
    bnn = jnp.zeros((n_layers, 1, ff), jnp.float32)
    wroot = jnp.zeros((n_layers, fmax, fmax), jnp.float32)
    bias = jnp.zeros((n_layers, 1, fmax), jnp.float32)
    for i, p in enumerate(layers):
        fi, fo = p['wroot'].shape
        wpad = jnp.zeros((3, fmax, fmax), jnp.float32).at[:, :fi, :fo].set(
            p['wnn_eff'].reshape(3, fi, fo))
        bpad = jnp.zeros((1, fmax, fmax), jnp.float32).at[:, :fi, :fo].set(
            p['bnn_eff'].reshape(1, fi, fo))
        wnn = wnn.at[i].set(wpad.reshape(3, ff))
        bnn = bnn.at[i].set(bpad.reshape(1, ff))
        wroot = wroot.at[i, :fi, :fo].set(p['wroot'])
        bias = bias.at[i, 0, :fo].set(p['bias'][0])

    # lane-aligned message-stage constants (0/1 -> exact in bf16 too):
    #   R_expand[f, f*fmax + j] = 1   (replicate each input channel fmax times)
    #   R_reduce[f*fmax + j, j] = 1   (sum the fmax-sized blocks back down)
    rexp = jnp.kron(jnp.eye(fmax, dtype=jnp.float32),
                    jnp.ones((1, fmax), jnp.float32))            # [fmax, ff]
    rred = jnp.kron(jnp.ones((fmax, 1), jnp.float32),
                    jnp.eye(fmax, dtype=jnp.float32))            # [ff, fmax]

    return dict(wnn=wnn, bnn=bnn, wroot=wroot, bias=bias, rexp=rexp, rred=rred,
                fmax=fmax, n_layers=n_layers,
                in_ch=layers[0]['wroot'].shape[0],
                out_ch=layers[-1]['wroot'].shape[1])


# ----------------------------- pure-JAX reference ----------------------------

def ref_forward(layers, x, pos, batch, idx, edge_index, *,
                patch_size=None, drop_act=False):
    row, col = edge_index[0], edge_index[1]
    n = x.shape[0]
    pseudo = (pos[col] - pos[row]).astype(jnp.float32)
    if patch_size is not None:
        pseudo = jnp.clip(pseudo / patch_size + 0.5, 0.0, 1.0)
    h = x.astype(jnp.float32)
    for i, p in enumerate(layers):
        fin, fout = p['wroot'].shape
        w_edge = jnp.maximum(pseudo @ p['wnn_eff'] + p['bnn_eff'], 0.0)
        msg = jnp.einsum('ef,efo->eo', h[row], w_edge.reshape(-1, fin, fout))
        s = jax.ops.segment_sum(msg, col, num_segments=n)
        cnt = jax.ops.segment_sum(jnp.ones((msg.shape[0],), jnp.float32), col,
                                  num_segments=n)
        aggr = s / jnp.clip(cnt, 1.0, None)[:, None]
        out = aggr + h @ p['wroot'] + p['bias']
        if not (i == len(layers) - 1 and drop_act):
            out = jnp.maximum(out, 0.0)
        h = out
    if idx is not None:
        return h[idx], pos[idx], batch[idx]
    return h, pos, batch


# ----------------------------- main ------------------------------------------

if __name__ == "__main__":
    key = jax.random.PRNGKey(0)
    k_x, k_pos, k_ei, k_p = jax.random.split(key, 4)

    N, E = 16, 48
    in_ch, hid_ch, out_ch = 8, 16, 8

    x = jax.random.normal(k_x, (N, in_ch), jnp.float32)
    pos = jax.random.normal(k_pos, (N, 3), jnp.float32)
    batch = jnp.zeros((N,), jnp.int32)
    edge_index = jax.random.randint(k_ei, (2, E), 0, N, dtype=jnp.int32)
    idx = jnp.arange(8, dtype=jnp.int32)

    layers = init_params(k_p, in_ch, hid_ch, out_ch, n_layers=3)
    packed = pack_params(layers)

    # default path: patch_size=None, drop_act=False, idx slicing, f32 matmuls
    out_x, out_pos, out_batch = ecgn_sa_forward(
        packed, x, pos, batch, idx, edge_index, patch_size=None, drop_act=False)
    jax.block_until_ready((out_x, out_pos, out_batch))

    ref_x, ref_pos, ref_batch = ref_forward(
        layers, x, pos, batch, idx, edge_index, patch_size=None, drop_act=False)
    jax.block_until_ready((ref_x, ref_pos, ref_batch))

    assert out_x.shape == (8, out_ch)
    assert jnp.allclose(out_x, ref_x, atol=1e-4, rtol=1e-4)
    assert jnp.allclose(out_pos, ref_pos)
    assert jnp.array_equal(out_batch, ref_batch)

    # second path: patch_size set, drop_act=True (last layer linear), no idx
    out_x2, _, _ = ecgn_sa_forward(
        packed, x, pos, batch, None, edge_index, patch_size=0.5, drop_act=True)
    ref_x2, _, _ = ref_forward(
        layers, x, pos, batch, None, edge_index, patch_size=0.5, drop_act=True)
    jax.block_until_ready(out_x2)
    assert out_x2.shape == (N, out_ch)
    assert jnp.allclose(out_x2, ref_x2, atol=1e-4, rtol=1e-4)

    # third path: bf16 structural-matmul fast path (looser tolerance vs f32 ref)
    out_x3, _, _ = ecgn_sa_forward(
        packed, x, pos, batch, idx, edge_index, patch_size=None, drop_act=False,
        mxu_dtype=jnp.bfloat16)
    jax.block_until_ready(out_x3)
    assert out_x3.shape == (8, out_ch)
    assert bool(jnp.all(jnp.isfinite(out_x3)))
    assert jnp.allclose(out_x3, ref_x, atol=0.15, rtol=0.15)

    print("KERNEL_OK")
</pallas_src>

<mosaic_0001>
module attributes {stable_mosaic.version = 11 : i64} {
  func.func @_ecgn_fused_kernel(%arg0: i32, %arg1: i32, %arg2: memref<128x16xf32, #tpu.memory_space<any>>, %arg3: memref<128x1xi32, #tpu.memory_space<vmem>>, %arg4: memref<1x128xi32, #tpu.memory_space<vmem>>, %arg5: memref<128x1xf32, #tpu.memory_space<vmem>>, %arg6: memref<128x3xf32, #tpu.memory_space<vmem>>, %arg7: memref<1x3x256xf32, #tpu.memory_space<vmem>>, %arg8: memref<1x1x256xf32, #tpu.memory_space<vmem>>, %arg9: memref<1x16x16xf32, #tpu.memory_space<vmem>>, %arg10: memref<1x1x16xf32, #tpu.memory_space<vmem>>, %arg11: memref<16x256xf32, #tpu.memory_space<vmem>>, %arg12: memref<256x16xf32, #tpu.memory_space<vmem>>, %arg13: memref<128x16xf32, #tpu.memory_space<vmem>>, %arg14: memref<128x16xf32, #tpu.memory_space<vmem>>, %arg15: memref<128x16xf32, #tpu.memory_space<vmem>>, %arg16: memref<!tpu.dma_semaphore, #tpu.memory_space<semaphore_mem>>) attributes {dimension_semantics = [#tpu.dimension_semantics<arbitrary>, #tpu.dimension_semantics<arbitrary>], iteration_bounds = array<i64: 3, 1>, scalar_prefetch = 0 : i64, scratch_operands = 3 : i64, tpu.core_type = #tpu.core_type<tc>, window_params = [{}, {transform_indices = @transform_1, window_bounds = array<i64: 128, 1>}, {transform_indices = @transform_2, window_bounds = array<i64: 1, 128>}, {transform_indices = @transform_3, window_bounds = array<i64: 128, 1>}, {transform_indices = @transform_4, window_bounds = array<i64: 128, 3>}, {transform_indices = @transform_5, window_bounds = array<i64: 1, 3, 256>}, {transform_indices = @transform_6, window_bounds = array<i64: 1, 1, 256>}, {transform_indices = @transform_7, window_bounds = array<i64: 1, 16, 16>}, {transform_indices = @transform_8, window_bounds = array<i64: 1, 1, 16>}, {pipeline_mode = #tpu.pipeline_mode<synchronous>, transform_indices = @transform_9, window_bounds = array<i64: 16, 256>}, {pipeline_mode = #tpu.pipeline_mode<synchronous>, transform_indices = @transform_10, window_bounds = array<i64: 256, 16>}, {pipeline_mode = #tpu.pipeline_mode<synchronous>, transform_indices = @transform_11, window_bounds = array<i64: 128, 16>}]} {
    %c0_i32 = arith.constant 0 : i32
    %0 = arith.cmpi eq, %arg0, %c0_i32 : i32
    %c0_i32_0 = arith.constant 0 : i32
    %1 = arith.cmpi eq, %arg1, %c0_i32_0 : i32
    %2 = arith.andi %0, %1 : i1
    %3 = arith.extui %2 : i1 to i32
    %c0_i32_1 = arith.constant 0 : i32
    %4 = arith.cmpi ne, %3, %c0_i32_1 : i32
    scf.if %4 {
      tpu.enqueue_dma source(%arg2 : memref<128x16xf32, #tpu.memory_space<any>>) target(%arg14 : memref<128x16xf32, #tpu.memory_space<vmem>>) target_semaphore(%arg16 : memref<!tpu.dma_semaphore, #tpu.memory_space<semaphore_mem>>)
      tpu.wait_dma2 semaphore(%arg16 : memref<!tpu.dma_semaphore, #tpu.memory_space<semaphore_mem>>) src(%arg2 : memref<128x16xf32, #tpu.memory_space<any>>) dst(%arg14 : memref<128x16xf32, #tpu.memory_space<vmem>>)
    } else {
    }
    %c0_i32_2 = arith.constant 0 : i32
    %5 = arith.cmpi eq, %arg1, %c0_i32_2 : i32
    %6 = arith.extui %5 : i1 to i32
    %c0_i32_3 = arith.constant 0 : i32
    %7 = arith.cmpi ne, %6, %c0_i32_3 : i32
    scf.if %7 {
      %cst_37 = arith.constant 0.000000e+00 : f32
      %67 = vector.broadcast %cst_37 : f32 to vector<128x16xf32>
      %c0_38 = arith.constant 0 : index
      %c0_39 = arith.constant 0 : index
      %68 = vector.load %arg15[%c0_38, %c0_39] : memref<128x16xf32, #tpu.memory_space<vmem>>, vector<128x16xf32>
      tpu.vector_store %arg15[%c0_38, %c0_39], %67 {strides = array<i32>} : memref<128x16xf32, #tpu.memory_space<vmem>>, vector<128x16xf32>,
    } else {
    }
    %c0 = arith.constant 0 : index
    %c0_4 = arith.constant 0 : index
    %8 = vector.load %arg6[%c0, %c0_4] : memref<128x3xf32, #tpu.memory_space<vmem>>, vector<128x3xf32>
    %c0_5 = arith.constant 0 : index
    %c0_6 = arith.constant 0 : index
    %c0_7 = arith.constant 0 : index
    %9 = vector.load %arg7[%c0_5, %c0_6, %c0_7] : memref<1x3x256xf32, #tpu.memory_space<vmem>>, vector<1x3x256xf32>
    %10 = vector.shape_cast %9 : vector<1x3x256xf32> to vector<3x256xf32>
    %c0_8 = arith.constant 0 : index
    %c0_9 = arith.constant 0 : index
    %c0_10 = arith.constant 0 : index
    %11 = vector.load %arg8[%c0_8, %c0_9, %c0_10] : memref<1x1x256xf32, #tpu.memory_space<vmem>>, vector<1x1x256xf32>
    %12 = vector.shape_cast %11 : vector<1x1x256xf32> to vector<1x256xf32>
    %13 = vector.extract_strided_slice %8 {offsets = [0, 0], sizes = [128, 1], strides = [1, 1]} : vector<128x3xf32> to vector<128x1xf32>
    %14 = vector.extract_strided_slice %10 {offsets = [0, 0], sizes = [1, 256], strides = [1, 1]} : vector<3x256xf32> to vector<1x256xf32>
    %15 = vector.broadcast %13 : vector<128x1xf32> to vector<128x256xf32>
    %16 = vector.broadcast %14 : vector<1x256xf32> to vector<128x256xf32>
    %17 = arith.mulf %15, %16 : vector<128x256xf32>
    %18 = vector.broadcast %12 : vector<1x256xf32> to vector<128x256xf32>
    %19 = arith.addf %18, %17 : vector<128x256xf32>
    %20 = vector.extract_strided_slice %8 {offsets = [0, 1], sizes = [128, 1], strides = [1, 1]} : vector<128x3xf32> to vector<128x1xf32>
    %21 = vector.extract_strided_slice %10 {offsets = [1, 0], sizes = [1, 256], strides = [1, 1]} : vector<3x256xf32> to vector<1x256xf32>
    %22 = vector.broadcast %20 : vector<128x1xf32> to vector<128x256xf32>
    %23 = vector.broadcast %21 : vector<1x256xf32> to vector<128x256xf32>
    %24 = arith.mulf %22, %23 : vector<128x256xf32>
    %25 = arith.addf %19, %24 : vector<128x256xf32>
    %26 = vector.extract_strided_slice %8 {offsets = [0, 2], sizes = [128, 1], strides = [1, 1]} : vector<128x3xf32> to vector<128x1xf32>
    %27 = vector.extract_strided_slice %10 {offsets = [2, 0], sizes = [1, 256], strides = [1, 1]} : vector<3x256xf32> to vector<1x256xf32>
    %28 = vector.broadcast %26 : vector<128x1xf32> to vector<128x256xf32>
    %29 = vector.broadcast %27 : vector<1x256xf32> to vector<128x256xf32>
    %30 = arith.mulf %28, %29 : vector<128x256xf32>
    %31 = arith.addf %25, %30 : vector<128x256xf32>
    %cst = arith.constant 0.000000e+00 : f32
    %32 = vector.broadcast %cst : f32 to vector<128x256xf32>
    %33 = arith.maximumf %31, %32 : vector<128x256xf32>
    %34 = tpu.iota {dimensions = array<i32: 1>} : vector<1x128xi32>
    %c0_11 = arith.constant 0 : index
    %c0_12 = arith.constant 0 : index
    %35 = vector.load %arg3[%c0_11, %c0_12] : memref<128x1xi32, #tpu.memory_space<vmem>>, vector<128x1xi32>
    %36 = vector.broadcast %35 : vector<128x1xi32> to vector<128x128xi32>
    %37 = vector.broadcast %34 : vector<1x128xi32> to vector<128x128xi32>
    %38 = arith.cmpi eq, %36, %37 : vector<128x128xi32>
    %cst_13 = arith.constant 1.000000e+00 : f32
    %cst_14 = arith.constant 0.000000e+00 : f32
    %39 = vector.broadcast %cst_13 : f32 to vector<128x128xf32>
    %40 = vector.broadcast %cst_14 : f32 to vector<128x128xf32>
    %41 = arith.select %38, %39, %40 : vector<128x128xi1>, vector<128x128xf32>
    %c0_15 = arith.constant 0 : index
    %c0_16 = arith.constant 0 : index
    %42 = vector.load %arg14[%c0_15, %c0_16] : memref<128x16xf32, #tpu.memory_space<vmem>>, vector<128x16xf32>
    %cst_17 = arith.constant dense<0.000000e+00> : vector<128x16xf32>
    %43 = tpu.matmul %41, %42, %cst_17 {dimension_numbers = #tpu.dot_dimension_numbers<[1], [0], [0], [1], [0, 0, 1, 1], [], []>} : vector<128x128xf32>, vector<128x16xf32>, vector<128x16xf32> -> vector<128x16xf32>
    %c0_18 = arith.constant 0 : index
    %c0_19 = arith.constant 0 : index
    %44 = vector.load %arg11[%c0_18, %c0_19] : memref<16x256xf32, #tpu.memory_space<vmem>>, vector<16x256xf32>
    %cst_20 = arith.constant dense<0.000000e+00> : vector<128x256xf32>
    %45 = tpu.matmul %43, %44, %cst_20 {dimension_numbers = #tpu.dot_dimension_numbers<[1], [0], [0], [1], [0, 0, 1, 1], [], []>} : vector<128x16xf32>, vector<16x256xf32>, vector<128x256xf32> -> vector<128x256xf32>
    %46 = arith.mulf %45, %33 : vector<128x256xf32>
    %c0_21 = arith.constant 0 : index
    %c0_22 = arith.constant 0 : index
    %47 = vector.load %arg12[%c0_21, %c0_22] : memref<256x16xf32, #tpu.memory_space<vmem>>, vector<256x16xf32>
    %cst_23 = arith.constant dense<0.000000e+00> : vector<128x16xf32>
    %48 = tpu.matmul %46, %47, %cst_23 {dimension_numbers = #tpu.dot_dimension_numbers<[1], [0], [0], [1], [0, 0, 1, 1], [], []>} : vector<128x256xf32>, vector<256x16xf32>, vector<128x16xf32> -> vector<128x16xf32>
    %c0_24 = arith.constant 0 : index
    %c0_25 = arith.constant 0 : index
    %49 = vector.load %arg5[%c0_24, %c0_25] : memref<128x1xf32, #tpu.memory_space<vmem>>, vector<128x1xf32>
    %50 = vector.broadcast %49 : vector<128x1xf32> to vector<128x16xf32>
    %51 = arith.mulf %48, %50 : vector<128x16xf32>
    %52 = tpu.iota {dimensions = array<i32: 0>} : vector<128x1xi32>
    %c0_26 = arith.constant 0 : index
    %c0_27 = arith.constant 0 : index
    %53 = vector.load %arg4[%c0_26, %c0_27] : memref<1x128xi32, #tpu.memory_space<vmem>>, vector<1x128xi32>
    %54 = vector.broadcast %52 : vector<128x1xi32> to vector<128x128xi32>
    %55 = vector.broadcast %53 : vector<1x128xi32> to vector<128x128xi32>
    %56 = arith.cmpi eq, %54, %55 : vector<128x128xi32>
    %cst_28 = arith.constant 1.000000e+00 : f32
    %cst_29 = arith.constant 0.000000e+00 : f32
    %57 = vector.broadcast %cst_28 : f32 to vector<128x128xf32>
    %58 = vector.broadcast %cst_29 : f32 to vector<128x128xf32>
    %59 = arith.select %56, %57, %58 : vector<128x128xi1>, vector<128x128xf32>
    %c0_30 = arith.constant 0 : index
    %c0_31 = arith.constant 0 : index
    %60 = vector.load %arg15[%c0_30, %c0_31] : memref<128x16xf32, #tpu.memory_space<vmem>>, vector<128x16xf32>
    %cst_32 = arith.constant dense<0.000000e+00> : vector<128x16xf32>
    %61 = tpu.matmul %59, %51, %cst_32 {dimension_numbers = #tpu.dot_dimension_numbers<[1], [0], [0], [1], [0, 0, 1, 1], [], []>} : vector<128x128xf32>, vector<128x16xf32>, vector<128x16xf32> -> vector<128x16xf32>
    %62 = arith.addf %60, %61 : vector<128x16xf32>
    %c0_33 = arith.constant 0 : index
    %c0_34 = arith.constant 0 : index
    %63 = vector.load %arg15[%c0_33, %c0_34] : memref<128x16xf32, #tpu.memory_space<vmem>>, vector<128x16xf32>
    tpu.vector_store %arg15[%c0_33, %c0_34], %62 {strides = array<i32>} : memref<128x16xf32, #tpu.memory_space<vmem>>, vector<128x16xf32>,
    %c0_i32_35 = arith.constant 0 : i32
    %64 = arith.cmpi eq, %arg1, %c0_i32_35 : i32
    %65 = arith.extui %64 : i1 to i32
    %c0_i32_36 = arith.constant 0 : i32
    %66 = arith.cmpi ne, %65, %c0_i32_36 : i32
    scf.if %66 {
      %c0_37 = arith.constant 0 : index
      %c0_38 = arith.constant 0 : index
      %67 = vector.load %arg14[%c0_37, %c0_38] : memref<128x16xf32, #tpu.memory_space<vmem>>, vector<128x16xf32>
      %c0_39 = arith.constant 0 : index
      %c0_40 = arith.constant 0 : index
      %68 = vector.load %arg15[%c0_39, %c0_40] : memref<128x16xf32, #tpu.memory_space<vmem>>, vector<128x16xf32>
      %c0_41 = arith.constant 0 : index
      %c0_42 = arith.constant 0 : index
      %c0_43 = arith.constant 0 : index
      %69 = vector.load %arg9[%c0_41, %c0_42, %c0_43] : memref<1x16x16xf32, #tpu.memory_space<vmem>>, vector<1x16x16xf32>
      %70 = vector.shape_cast %69 : vector<1x16x16xf32> to vector<16x16xf32>
      %cst_44 = arith.constant dense<0.000000e+00> : vector<128x16xf32>
      %71 = tpu.matmul %67, %70, %cst_44 {dimension_numbers = #tpu.dot_dimension_numbers<[1], [0], [0], [1], [0, 0, 1, 1], [], []>} : vector<128x16xf32>, vector<16x16xf32>, vector<128x16xf32> -> vector<128x16xf32>
      %72 = arith.addf %68, %71 : vector<128x16xf32>
      %c0_45 = arith.constant 0 : index
      %c0_46 = arith.constant 0 : index
      %c0_47 = arith.constant 0 : index
      %73 = vector.load %arg10[%c0_45, %c0_46, %c0_47] : memref<1x1x16xf32, #tpu.memory_space<vmem>>, vector<1x1x16xf32>
      %74 = vector.shape_cast %73 : vector<1x1x16xf32> to vector<1x16xf32>
      %75 = vector.broadcast %74 : vector<1x16xf32> to vector<128x16xf32>
      %76 = arith.addf %72, %75 : vector<128x16xf32>
      %cst_48 = arith.constant 0.000000e+00 : f32
      %77 = vector.broadcast %cst_48 : f32 to vector<128x16xf32>
      %78 = arith.maximumf %76, %77 : vector<128x16xf32>
      %c0_49 = arith.constant 0 : index
      %c0_50 = arith.constant 0 : index
      %79 = vector.load %arg14[%c0_49, %c0_50] : memref<128x16xf32, #tpu.memory_space<vmem>>, vector<128x16xf32>
      tpu.vector_store %arg14[%c0_49, %c0_50], %78 {strides = array<i32>} : memref<128x16xf32, #tpu.memory_space<vmem>>, vector<128x16xf32>,
      %c2_i32 = arith.constant 2 : i32
      %80 = arith.cmpi eq, %arg0, %c2_i32 : i32
      %81 = arith.extui %80 : i1 to i32
      %c0_i32_51 = arith.constant 0 : i32
      %82 = arith.cmpi ne, %81, %c0_i32_51 : i32
      scf.if %82 {
        %c0_52 = arith.constant 0 : index
        %c0_53 = arith.constant 0 : index
        %83 = vector.load %arg13[%c0_52, %c0_53] : memref<128x16xf32, #tpu.memory_space<vmem>>, vector<128x16xf32>
        tpu.vector_store %arg13[%c0_52, %c0_53], %78 {strides = array<i32>} : memref<128x16xf32, #tpu.memory_space<vmem>>, vector<128x16xf32>,
      } else {
      }
    } else {
    }
    return
  }
  func.func @transform_1(%arg0: i32, %arg1: i32) -> (i32, i32) {
    %c0_i32 = arith.constant 0 : i32
    %c0_i32_0 = arith.constant 0 : i32
    return %arg1, %c0_i32 : i32, i32
  }
  func.func @transform_2(%arg0: i32, %arg1: i32) -> (i32, i32) {
    %c0_i32 = arith.constant 0 : i32
    %c0_i32_0 = arith.constant 0 : i32
    return %c0_i32, %arg1 : i32, i32
  }
  func.func @transform_3(%arg0: i32, %arg1: i32) -> (i32, i32) {
    %c0_i32 = arith.constant 0 : i32
    %c0_i32_0 = arith.constant 0 : i32
    return %arg1, %c0_i32 : i32, i32
  }
  func.func @transform_4(%arg0: i32, %arg1: i32) -> (i32, i32) {
    %c0_i32 = arith.constant 0 : i32
    %c0_i32_0 = arith.constant 0 : i32
    return %arg1, %c0_i32 : i32, i32
  }
  func.func @transform_5(%arg0: i32, %arg1: i32) -> (i32, i32, i32) {
    %c0_i32 = arith.constant 0 : i32
    %c0_i32_0 = arith.constant 0 : i32
    %c0_i32_1 = arith.constant 0 : i32
    return %arg0, %c0_i32, %c0_i32_0 : i32, i32, i32
  }
  func.func @transform_6(%arg0: i32, %arg1: i32) -> (i32, i32, i32) {
    %c0_i32 = arith.constant 0 : i32
    %c0_i32_0 = arith.constant 0 : i32
    %c0_i32_1 = arith.constant 0 : i32
    return %arg0, %c0_i32, %c0_i32_0 : i32, i32, i32
  }
  func.func @transform_7(%arg0: i32, %arg1: i32) -> (i32, i32, i32) {
    %c0_i32 = arith.constant 0 : i32
    %c0_i32_0 = arith.constant 0 : i32
    %c0_i32_1 = arith.constant 0 : i32
    return %arg0, %c0_i32, %c0_i32_0 : i32, i32, i32
  }
  func.func @transform_8(%arg0: i32, %arg1: i32) -> (i32, i32, i32) {
    %c0_i32 = arith.constant 0 : i32
    %c0_i32_0 = arith.constant 0 : i32
    %c0_i32_1 = arith.constant 0 : i32
    return %arg0, %c0_i32, %c0_i32_0 : i32, i32, i32
  }
  func.func @transform_9(%arg0: i32, %arg1: i32) -> (i32, i32) {
    %c0_i32 = arith.constant 0 : i32
    %c0_i32_0 = arith.constant 0 : i32
    %c0_i32_1 = arith.constant 0 : i32
    return %c0_i32, %c0_i32_0 : i32, i32
  }
  func.func @transform_10(%arg0: i32, %arg1: i32) -> (i32, i32) {
    %c0_i32 = arith.constant 0 : i32
    %c0_i32_0 = arith.constant 0 : i32
    %c0_i32_1 = arith.constant 0 : i32
    return %c0_i32, %c0_i32_0 : i32, i32
  }
  func.func @transform_11(%arg0: i32, %arg1: i32) -> (i32, i32) {
    %c0_i32 = arith.constant 0 : i32
    %c0_i32_0 = arith.constant 0 : i32
    %c0_i32_1 = arith.constant 0 : i32
    return %c0_i32, %c0_i32_0 : i32, i32
  }
}

</mosaic_0001>

<llo_original>
// kernel: tpu_custom_call.1
$region0: #{tpu_custom_call.1}
  #allocation0 [shape = 'u32[]', space=smem, size = 0x4, offset = 0x4, fixed_abs, tag = 'smem constant byte address 0x4 - core index']
  #allocation1 [shape = 'u32[144,128]{1,0:T(1,128)}', space=vmem, size = 0x12000, scoped, tag = 'internal scratch']
  #allocation2 [shape = 'f32[128,16]{1,0:T(8,128)}', space=vmem, size = 0x10000, scoped, tag = 'scratch operand']
  #allocation3 [shape = 'f32[128,16]{1,0:T(8,128)}', space=vmem, size = 0x10000, scoped, tag = 'scratch operand']
  #allocation4 [shape = 's32[1]{0}', space=sflag, size = 0x4, scoped, tag = 'scratch operand']
  #allocation5 [shape = 's32[]', space=sflag, size = 0x4, offset = 0, fixed_abs, tag = 'sflag constant byte address 0x0 - dummy sync flag']
  %s0 = inlined_call_operand.vmem [shape: f32[128,16], index: 0, kind: input, shape index: {}]
  %s1 = inlined_call_operand.vmem [shape: s32[128,1], index: 1, kind: input, shape index: {}]
  %s2 = inlined_call_operand.vmem [shape: s32[1,128], index: 2, kind: input, shape index: {}]
  %s3 = inlined_call_operand.vmem [shape: f32[128,1], index: 3, kind: input, shape index: {}]
  %s4 = inlined_call_operand.vmem [shape: f32[128,3], index: 4, kind: input, shape index: {}]
  %s5 = inlined_call_operand.vmem [shape: f32[3,3,256], index: 5, kind: input, shape index: {}]
  %s6 = inlined_call_operand.vmem [shape: f32[3,1,256], index: 6, kind: input, shape index: {}]
  %s7 = inlined_call_operand.vmem [shape: f32[3,16,16], index: 7, kind: input, shape index: {}]
  %s8 = inlined_call_operand.vmem [shape: f32[3,1,16], index: 8, kind: input, shape index: {}]
  %s9 = inlined_call_operand.vmem [shape: f32[16,256], index: 9, kind: input, shape index: {}]
  %s10 = inlined_call_operand.vmem [shape: f32[256,16], index: 10, kind: input, shape index: {}]
  %s11 = inlined_call_operand.vmem [shape: f32[128,16], index: 11, kind: output, shape index: {}]
  %s12 = sld [smem:[#allocation0]]
  $region123: #{tpu_custom_call.1} parent=0
    _
  %s14 = ssub.s32 1, %s12
  %s15 = scalar_select 0, %s14, %s12
  loop: start=0, step=1, limit=5
  $region2: #{tpu_custom_call.1} parent=0 // loop_pre_header
    _
  $region3: #{tpu_custom_call.1} parent=0 // loop_header
    %s17 = sphi 0, %s21
    %p18 = scmp.ge.s32.totalorder %s17, 5
    %s24 = sphi 0, %s36
    %s25 = sphi 0, %s32
    %s26 = sphi 0, %s24
    %s27 = sphi 0, %s25
    %s28 = sphi 0, %s26
    %s29 = sphi 0, %s27
    %s39 = sphi 0, %s41
    %s42 = sphi 0, %s39
    %s43 = sphi 0, %s42
    %s59 = sphi 0, %s43
    %s65 = sphi 0, %s67
    %s68 = sphi 0, %s65
    %s69 = sphi 0, %s68
    %s85 = sphi 0, %s69
    %s91 = sphi 0, %s93
    %s94 = sphi 0, %s91
    %s95 = sphi 0, %s94
    %s111 = sphi 0, %s95
    %s117 = sphi 0, %s119
    %s120 = sphi 0, %s117
    %s121 = sphi 0, %s120
    %s137 = sphi 0, %s121
    %s143 = sphi 0, %s145
    %s146 = sphi 0, %s143
    %s147 = sphi 0, %s146
    %s163 = sphi 0, %s147
    %s169 = sphi 0, %s171
    %s172 = sphi 0, %s169
    %s173 = sphi 0, %s172
    %s189 = sphi 0, %s173
    %s195 = sphi 0, %s197
    %s198 = sphi 0, %s195
    %s199 = sphi 0, %s198
    %s215 = sphi 0, %s199
    %s221 = sphi 0, %s223
    %s224 = sphi 0, %s221
    %s225 = sphi 0, %s224
    %s241 = sphi 0, %s225
    %s245 = sphi 0, %s245
    %s247 = sphi 0, %s245
    %s248 = sphi 0, %s247
    %s262 = sphi 0, %s248
    %s266 = sphi 0, %s266
    %s268 = sphi 0, %s266
    %s269 = sphi 0, %s268
    %s283 = sphi 0, %s269
    %s287 = sphi 0, %s287
    %s289 = sphi 0, %s287
    %s290 = sphi 0, %s289
    %s304 = sphi 0, %s290
  $region4: #{tpu_custom_call.1} parent=0 // loop_header_branch
    %20 = sbr.rel (%p18) target = $region8
  $region5: #{tpu_custom_call.1} parent=0 // loop_body
    %s22 = ssub.s32 %s17, 1
    %s23 = ssub.s32 %s17, 2
    %s30 = sadd.s32 1, %s25
    %p31 = scmp.ge.s32.totalorder %s30, 1
    %s32 = scalar_select %p31, 0, %s30
    %s33 = sadd.s32 1, %s24
    %s34 = scalar_select %p31, %s33, %s24
    %p35 = scmp.ge.s32.totalorder %s34, 3
    %s36 = scalar_select %p35, 0, %s34
    %s37 = ssub.s32 %s25, %s32
    %p38 = scmp.eq.s32.totalorder %s37, 0
    %s40 = sadd.s32 %s39, 1
    %s41 = scalar_select %p38, %s39, %s40
    %p44 = pneg %p38
    %p45 = scmp.eq.s32.totalorder %s17, 2
    %p46 = por %p44, %p45
    %p47 = scmp.ne.s32.totalorder %s39, %s42
    %p48 = scmp.eq.s32.totalorder %s17, 0
    %p49 = por %p47, %p48
    %p50 = scmp.ne.s32.totalorder %s39, %s42
    %p51 = scmp.eq.s32.totalorder %s22, 2
    %p52 = por %p50, %p51
    %p53 = scmp.ne.s32.totalorder %s42, %s43
    %p54 = scmp.eq.s32.totalorder %s22, 0
    %p55 = por %p53, %p54
    %p56 = scmp.ne.s32.totalorder %s42, %s43
    %p57 = scmp.eq.s32.totalorder %s23, 2
    %p58 = por %p56, %p57
    %p60 = scmp.ne.s32.totalorder %s43, %s59
    %p61 = scmp.eq.s32.totalorder %s23, 0
    %p62 = por %p60, %p61
    %s63 = ssub.s32 %s25, %s32
    %p64 = scmp.eq.s32.totalorder %s63, 0
    %s66 = sadd.s32 %s65, 1
    %s67 = scalar_select %p64, %s65, %s66
    %p70 = pneg %p64
    %p71 = scmp.eq.s32.totalorder %s17, 2
    %p72 = por %p70, %p71
    %p73 = scmp.ne.s32.totalorder %s65, %s68
    %p74 = scmp.eq.s32.totalorder %s17, 0
    %p75 = por %p73, %p74
    %p76 = scmp.ne.s32.totalorder %s65, %s68
    %p77 = scmp.eq.s32.totalorder %s22, 2
    %p78 = por %p76, %p77
    %p79 = scmp.ne.s32.totalorder %s68, %s69
    %p80 = scmp.eq.s32.totalorder %s22, 0
    %p81 = por %p79, %p80
    %p82 = scmp.ne.s32.totalorder %s68, %s69
    %p83 = scmp.eq.s32.totalorder %s23, 2
    %p84 = por %p82, %p83
    %p86 = scmp.ne.s32.totalorder %s69, %s85
    %p87 = scmp.eq.s32.totalorder %s23, 0
    %p88 = por %p86, %p87
    %s89 = ssub.s32 %s25, %s32
    %p90 = scmp.eq.s32.totalorder %s89, 0
    %s92 = sadd.s32 %s91, 1
    %s93 = scalar_select %p90, %s91, %s92
    %p96 = pneg %p90
    %p97 = scmp.eq.s32.totalorder %s17, 2
    %p98 = por %p96, %p97
    %p99 = scmp.ne.s32.totalorder %s91, %s94
    %p100 = scmp.eq.s32.totalorder %s17, 0
    %p101 = por %p99, %p100
    %p102 = scmp.ne.s32.totalorder %s91, %s94
    %p103 = scmp.eq.s32.totalorder %s22, 2
    %p104 = por %p102, %p103
    %p105 = scmp.ne.s32.totalorder %s94, %s95
    %p106 = scmp.eq.s32.totalorder %s22, 0
    %p107 = por %p105, %p106
    %p108 = scmp.ne.s32.totalorder %s94, %s95
    %p109 = scmp.eq.s32.totalorder %s23, 2
    %p110 = por %p108, %p109
    %p112 = scmp.ne.s32.totalorder %s95, %s111
    %p113 = scmp.eq.s32.totalorder %s23, 0
    %p114 = por %p112, %p113
    %s115 = ssub.s32 %s25, %s32
    %p116 = scmp.eq.s32.totalorder %s115, 0
    %s118 = sadd.s32 %s117, 1
    %s119 = scalar_select %p116, %s117, %s118
    %p122 = pneg %p116
    %p123 = scmp.eq.s32.totalorder %s17, 2
    %p124 = por %p122, %p123
    %p125 = scmp.ne.s32.totalorder %s117, %s120
    %p126 = scmp.eq.s32.totalorder %s17, 0
    %p127 = por %p125, %p126
    %p128 = scmp.ne.s32.totalorder %s117, %s120
    %p129 = scmp.eq.s32.totalorder %s22, 2
    %p130 = por %p128, %p129
    %p131 = scmp.ne.s32.totalorder %s120, %s121
    %p132 = scmp.eq.s32.totalorder %s22, 0
    %p133 = por %p131, %p132
    %p134 = scmp.ne.s32.totalorder %s120, %s121
    %p135 = scmp.eq.s32.totalorder %s23, 2
    %p136 = por %p134, %p135
    %p138 = scmp.ne.s32.totalorder %s121, %s137
    %p139 = scmp.eq.s32.totalorder %s23, 0
    %p140 = por %p138, %p139
    %s141 = ssub.s32 %s24, %s36
    %p142 = scmp.eq.s32.totalorder %s141, 0
    %s144 = sadd.s32 %s143, 1
    %s145 = scalar_select %p142, %s143, %s144
    %p148 = pneg %p142
    %p149 = scmp.eq.s32.totalorder %s17, 2
    %p150 = por %p148, %p149
    %p151 = scmp.ne.s32.totalorder %s143, %s146
    %p152 = scmp.eq.s32.totalorder %s17, 0
    %p153 = por %p151, %p152
    %p154 = scmp.ne.s32.totalorder %s143, %s146
    %p155 = scmp.eq.s32.totalorder %s22, 2
    %p156 = por %p154, %p155
    %p157 = scmp.ne.s32.totalorder %s146, %s147
    %p158 = scmp.eq.s32.totalorder %s22, 0
    %p159 = por %p157, %p158
    %p160 = scmp.ne.s32.totalorder %s146, %s147
    %p161 = scmp.eq.s32.totalorder %s23, 2
    %p162 = por %p160, %p161
    %p164 = scmp.ne.s32.totalorder %s147, %s163
    %p165 = scmp.eq.s32.totalorder %s23, 0
    %p166 = por %p164, %p165
    %s167 = ssub.s32 %s24, %s36
    %p168 = scmp.eq.s32.totalorder %s167, 0
    %s170 = sadd.s32 %s169, 1
    %s171 = scalar_select %p168, %s169, %s170
    %p174 = pneg %p168
    %p175 = scmp.eq.s32.totalorder %s17, 2
    %p176 = por %p174, %p175
    %p177 = scmp.ne.s32.totalorder %s169, %s172
    %p178 = scmp.eq.s32.totalorder %s17, 0
    %p179 = por %p177, %p178
    %p180 = scmp.ne.s32.totalorder %s169, %s172
    %p181 = scmp.eq.s32.totalorder %s22, 2
    %p182 = por %p180, %p181
    %p183 = scmp.ne.s32.totalorder %s172, %s173
    %p184 = scmp.eq.s32.totalorder %s22, 0
    %p185 = por %p183, %p184
    %p186 = scmp.ne.s32.totalorder %s172, %s173
    %p187 = scmp.eq.s32.totalorder %s23, 2
    %p188 = por %p186, %p187
    %p190 = scmp.ne.s32.totalorder %s173, %s189
    %p191 = scmp.eq.s32.totalorder %s23, 0
    %p192 = por %p190, %p191
    %s193 = ssub.s32 %s24, %s36
    %p194 = scmp.eq.s32.totalorder %s193, 0
    %s196 = sadd.s32 %s195, 1
    %s197 = scalar_select %p194, %s195, %s196
    %p200 = pneg %p194
    %p201 = scmp.eq.s32.totalorder %s17, 2
    %p202 = por %p200, %p201
    %p203 = scmp.ne.s32.totalorder %s195, %s198
    %p204 = scmp.eq.s32.totalorder %s17, 0
    %p205 = por %p203, %p204
    %p206 = scmp.ne.s32.totalorder %s195, %s198
    %p207 = scmp.eq.s32.totalorder %s22, 2
    %p208 = por %p206, %p207
    %p209 = scmp.ne.s32.totalorder %s198, %s199
    %p210 = scmp.eq.s32.totalorder %s22, 0
    %p211 = por %p209, %p210
    %p212 = scmp.ne.s32.totalorder %s198, %s199
    %p213 = scmp.eq.s32.totalorder %s23, 2
    %p214 = por %p212, %p213
    %p216 = scmp.ne.s32.totalorder %s199, %s215
    %p217 = scmp.eq.s32.totalorder %s23, 0
    %p218 = por %p216, %p217
    %s219 = ssub.s32 %s24, %s36
    %p220 = scmp.eq.s32.totalorder %s219, 0
    %s222 = sadd.s32 %s221, 1
    %s223 = scalar_select %p220, %s221, %s222
    %p226 = pneg %p220
    %p227 = scmp.eq.s32.totalorder %s17, 2
    %p228 = por %p226, %p227
    %p229 = scmp.ne.s32.totalorder %s221, %s224
    %p230 = scmp.eq.s32.totalorder %s17, 0
    %p231 = por %p229, %p230
    %p232 = scmp.ne.s32.totalorder %s221, %s224
    %p233 = scmp.eq.s32.totalorder %s22, 2
    %p234 = por %p232, %p233
    %p235 = scmp.ne.s32.totalorder %s224, %s225
    %p236 = scmp.eq.s32.totalorder %s22, 0
    %p237 = por %p235, %p236
    %p238 = scmp.ne.s32.totalorder %s224, %s225
    %p239 = scmp.eq.s32.totalorder %s23, 2
    %p240 = por %p238, %p239
    %p242 = scmp.ne.s32.totalorder %s225, %s241
    %p243 = scmp.eq.s32.totalorder %s23, 0
    %p244 = por %p242, %p243
    %s246 = sadd.s32 %s245, 1
    %p249 = scmp.eq.s32.totalorder %s17, 2
    %p250 = scmp.ne.s32.totalorder %s245, %s247
    %p251 = scmp.eq.s32.totalorder %s17, 0
    %p252 = por %p250, %p251
    %p253 = scmp.ne.s32.totalorder %s245, %s247
    %p254 = scmp.eq.s32.totalorder %s22, 2
    %p255 = por %p253, %p254
    %p256 = scmp.ne.s32.totalorder %s247, %s248
    %p257 = scmp.eq.s32.totalorder %s22, 0
    %p258 = por %p256, %p257
    %p259 = scmp.ne.s32.totalorder %s247, %s248
    %p260 = scmp.eq.s32.totalorder %s23, 2
    %p261 = por %p259, %p260
    %p263 = scmp.ne.s32.totalorder %s248, %s262
    %p264 = scmp.eq.s32.totalorder %s23, 0
    %p265 = por %p263, %p264
    %s267 = sadd.s32 %s266, 1
    %p270 = scmp.eq.s32.totalorder %s17, 2
    %p271 = scmp.ne.s32.totalorder %s266, %s268
    %p272 = scmp.eq.s32.totalorder %s17, 0
    %p273 = por %p271, %p272
    %p274 = scmp.ne.s32.totalorder %s266, %s268
    %p275 = scmp.eq.s32.totalorder %s22, 2
    %p276 = por %p274, %p275
    %p277 = scmp.ne.s32.totalorder %s268, %s269
    %p278 = scmp.eq.s32.totalorder %s22, 0
    %p279 = por %p277, %p278
    %p280 = scmp.ne.s32.totalorder %s268, %s269
    %p281 = scmp.eq.s32.totalorder %s23, 2
    %p282 = por %p280, %p281
    %p284 = scmp.ne.s32.totalorder %s269, %s283
    %p285 = scmp.eq.s32.totalorder %s23, 0
    %p286 = por %p284, %p285
    %s288 = sadd.s32 %s287, 1
    %p291 = scmp.eq.s32.totalorder %s17, 2
    %p292 = scmp.ne.s32.totalorder %s287, %s289
    %p293 = scmp.eq.s32.totalorder %s17, 0
    %p294 = por %p292, %p293
    %p295 = scmp.ne.s32.totalorder %s287, %s289
    %p296 = scmp.eq.s32.totalorder %s22, 2
    %p297 = por %p295, %p296
    %p298 = scmp.ne.s32.totalorder %s289, %s290
    %p299 = scmp.eq.s32.totalorder %s22, 0
    %p300 = por %p298, %p299
    %p301 = scmp.ne.s32.totalorder %s289, %s290
    %p302 = scmp.eq.s32.totalorder %s23, 2
    %p303 = por %p301, %p302
    %p305 = scmp.ne.s32.totalorder %s290, %s304
    %p306 = scmp.eq.s32.totalorder %s23, 0
    %p307 = por %p305, %p306
    %p308 = scmp.le.s32.totalorder 1, %s17
    %p309 = scmp.lt.s32.totalorder %s17, 4
    %p310 = pnand %p308, %p309
    %p311 = pneg %p310
    // Predicated region
    $region9: #{tpu_custom_call.1} parent=5 // pred_check
      _
    $region10: #{tpu_custom_call.1} parent=5 // pred_check_branch
      %313 = sbr.rel (%p310) target = $region12
    $region11: #{tpu_custom_call.1} parent=5 // pred_region
      %s314 = ssub.s32 %s17, 1
      // Predicated region
      $region13: #{tpu_custom_call.1} parent=11 // pred_check
        %p315 = pneg %p55
      $region14: #{tpu_custom_call.1} parent=11 // pred_check_branch
        %317 = sbr.rel (%p315) target = $region16
      $region15: #{tpu_custom_call.1} parent=11 // pred_region
        %s318 = smul.u32 16, %s27
        %p319 = scmp.lt.s32.totalorder %s318, 15
        %s320 = scalar_select %p319, %s318, 15
        %s321 = smul.addr %s320, 8
        %s322 = scalar_lea.vmem %s1, %s321
        %s323 = smul.u32 16, %s27
      $region16: #{tpu_custom_call.1} parent=11 // pred_fallthru
        _
      // Predicated region
      $region17: #{tpu_custom_call.1} parent=11 // pred_check
        %p324 = pneg %p81
      $region18: #{tpu_custom_call.1} parent=11 // pred_check_branch
        %326 = sbr.rel (%p324) target = $region20
      $region19: #{tpu_custom_call.1} parent=11 // pred_region
        %p327 = scmp.lt.s32.totalorder %s27, 0
        %s328 = scalar_select %p327, %s27, 0
        %s329 = scalar_lea.vmem %s2, %s328
      $region20: #{tpu_custom_call.1} parent=11 // pred_fallthru
        _
      // Predicated region
      $region21: #{tpu_custom_call.1} parent=11 // pred_check
        %p330 = pneg %p107
      $region22: #{tpu_custom_call.1} parent=11 // pred_check_branch
        %332 = sbr.rel (%p330) target = $region24
      $region23: #{tpu_custom_call.1} parent=11 // pred_region
        %s333 = smul.u32 16, %s27
        %p334 = scmp.lt.s32.totalorder %s333, 15
        %s335 = scalar_select %p334, %s333, 15
        %s336 = smul.addr %s335, 8
        %s337 = scalar_lea.vmem %s3, %s336
        %s338 = smul.u32 16, %s27
      $region24: #{tpu_custom_call.1} parent=11 // pred_fallthru
        _
      // Predicated region
      $region25: #{tpu_custom_call.1} parent=11 // pred_check
        %p339 = pneg %p133
      $region26: #{tpu_custom_call.1} parent=11 // pred_check_branch
        %341 = sbr.rel (%p339) target = $region28
      $region27: #{tpu_custom_call.1} parent=11 // pred_region
        %s342 = smul.u32 16, %s27
        %p343 = scmp.lt.s32.totalorder %s342, 15
        %s344 = scalar_select %p343, %s342, 15
        %s345 = smul.addr %s344, 8
        %s346 = scalar_lea.vmem %s4, %s345
        %s347 = smul.u32 16, %s27
      $region28: #{tpu_custom_call.1} parent=11 // pred_fallthru
        _
      // Predicated region
      $region29: #{tpu_custom_call.1} parent=11 // pred_check
        %p348 = pneg %p258
      $region30: #{tpu_custom_call.1} parent=11 // pred_check_branch
        %350 = sbr.rel (%p348) target = $region32
      $region31: #{tpu_custom_call.1} parent=11 // pred_region
        _
      $region32: #{tpu_custom_call.1} parent=11 // pred_fallthru
        _
      // Predicated region
      $region33: #{tpu_custom_call.1} parent=11 // pred_check
        %p351 = pneg %p279
      $region34: #{tpu_custom_call.1} parent=11 // pred_check_branch
        %353 = sbr.rel (%p351) target = $region36
      $region35: #{tpu_custom_call.1} parent=11 // pred_region
        _
      $region36: #{tpu_custom_call.1} parent=11 // pred_fallthru
        _
    $region12: #{tpu_custom_call.1} parent=5 // pred_fallthru
      _
    %p354 = scmp.lt.s32.totalorder %s17, 3
    // Predicated region
    $region37: #{tpu_custom_call.1} parent=5 // pred_check
      %p355 = pneg %p354
    $region38: #{tpu_custom_call.1} parent=5 // pred_check_branch
      %357 = sbr.rel (%p355) target = $region40
    $region39: #{tpu_custom_call.1} parent=5 // pred_region
      // Predicated region
      $region41: #{tpu_custom_call.1} parent=39 // pred_check
        %p358 = pneg %p153
      $region42: #{tpu_custom_call.1} parent=39 // pred_check_branch
        %360 = sbr.rel (%p358) target = $region44
      $region43: #{tpu_custom_call.1} parent=39 // pred_region
        %p361 = scmp.lt.s32.totalorder %s24, 2
        %s362 = scalar_select %p361, %s24, 2
        %s363 = smul.addr %s362, 2
        %s364 = smul.addr %s363, 4
        %s365 = scalar_lea.vmem %s5, %s364
      $region44: #{tpu_custom_call.1} parent=39 // pred_fallthru
        _
      // Predicated region
      $region45: #{tpu_custom_call.1} parent=39 // pred_check
        %p366 = pneg %p179
      $region46: #{tpu_custom_call.1} parent=39 // pred_check_branch
        %368 = sbr.rel (%p366) target = $region48
      $region47: #{tpu_custom_call.1} parent=39 // pred_region
        %p369 = scmp.lt.s32.totalorder %s24, 2
        %s370 = scalar_select %p369, %s24, 2
        %s371 = smul.addr %s370, 2
        %s372 = scalar_lea.vmem %s6, %s371
      $region48: #{tpu_custom_call.1} parent=39 // pred_fallthru
        _
      // Predicated region
      $region49: #{tpu_custom_call.1} parent=39 // pred_check
        %p373 = pneg %p205
      $region50: #{tpu_custom_call.1} parent=39 // pred_check_branch
        %375 = sbr.rel (%p373) target = $region52
      $region51: #{tpu_custom_call.1} parent=39 // pred_region
        %p376 = scmp.lt.s32.totalorder %s24, 2
        %s377 = scalar_select %p376, %s24, 2
        %s378 = smul.addr %s377, 2
        %s379 = smul.addr %s378, 8
        %s380 = scalar_lea.vmem %s7, %s379
      $region52: #{tpu_custom_call.1} parent=39 // pred_fallthru
        _
      // Predicated region
      $region53: #{tpu_custom_call.1} parent=39 // pred_check
        %p381 = pneg %p231
      $region54: #{tpu_custom_call.1} parent=39 // pred_check_branch
        %383 = sbr.rel (%p381) target = $region56
      $region55: #{tpu_custom_call.1} parent=39 // pred_region
        %p384 = scmp.lt.s32.totalorder %s24, 2
        %s385 = scalar_select %p384, %s24, 2
        %s386 = scalar_lea.vmem %s8, %s385
      $region56: #{tpu_custom_call.1} parent=39 // pred_fallthru
        _
    $region40: #{tpu_custom_call.1} parent=5 // pred_fallthru
      _
    %p387 = scmp.le.s32.totalorder 1, %s17
    %p388 = scmp.lt.s32.totalorder %s17, 4
    %p389 = pnand %p387, %p388
    %p390 = pneg %p389
    // Predicated region
    $region57: #{tpu_custom_call.1} parent=5 // pred_check
      _
    $region58: #{tpu_custom_call.1} parent=5 // pred_check_branch
      %392 = sbr.rel (%p389) target = $region60
    $region59: #{tpu_custom_call.1} parent=5 // pred_region
      %s393 = ssub.s32 %s17, 1
      %s394 = smul.u32 16, %s27
      %p395 = scmp.lt.s32.totalorder %s394, 15
      %s396 = scalar_select %p395, %s394, 15
      %s397 = smul.addr %s396, 8
      %s398 = scalar_lea.vmem %s1, %s397
      %p399 = pneg %p55
      %p400 = pneg %p52
      %p401 = scmp.lt.s32.totalorder %s27, 0
      %s402 = scalar_select %p401, %s27, 0
      %s403 = scalar_lea.vmem %s2, %s402
      %p404 = pneg %p81
      %p405 = pneg %p78
      %s406 = smul.u32 16, %s27
      %p407 = scmp.lt.s32.totalorder %s406, 15
      %s408 = scalar_select %p407, %s406, 15
      %s409 = smul.addr %s408, 8
      %s410 = scalar_lea.vmem %s3, %s409
      %p411 = pneg %p107
      %p412 = pneg %p104
      %s413 = smul.u32 16, %s27
      %p414 = scmp.lt.s32.totalorder %s413, 15
      %s415 = scalar_select %p414, %s413, 15
      %s416 = smul.addr %s415, 8
      %s417 = scalar_lea.vmem %s4, %s416
      %p418 = pneg %p133
      %p419 = pneg %p130
      %p420 = scmp.lt.s32.totalorder %s26, 2
      %s421 = scalar_select %p420, %s26, 2
      %s422 = smul.addr %s421, 2
      %s423 = smul.addr %s422, 4
      %s424 = scalar_lea.vmem %s5, %s423
      %p425 = pneg %p159
      %p426 = pneg %p156
      %p427 = scmp.lt.s32.totalorder %s26, 2
      %s428 = scalar_select %p427, %s26, 2
      %s429 = smul.addr %s428, 2
      %s430 = scalar_lea.vmem %s6, %s429
      %p431 = pneg %p185
      %p432 = pneg %p182
      %p433 = scmp.lt.s32.totalorder %s26, 2
      %s434 = scalar_select %p433, %s26, 2
      %s435 = smul.addr %s434, 2
      %s436 = smul.addr %s435, 8
      %s437 = scalar_lea.vmem %s7, %s436
      %p438 = pneg %p211
      %p439 = pneg %p208
      %p440 = scmp.lt.s32.totalorder %s26, 2
      %s441 = scalar_select %p440, %s26, 2
      %s442 = scalar_lea.vmem %s8, %s441
      %p443 = pneg %p237
      %p444 = pneg %p234
      %p445 = pneg %p258
      %p446 = pneg %p255
      %p447 = pneg %p279
      %p448 = pneg %p276
      %p449 = pneg %p300
      %p450 = pneg %p297
      %s451 = smul.u32 16, %s27
      %p452 = scmp.lt.s32.totalorder %s451, 15
      %s453 = scalar_select %p452, %s451, 15
      %s454 = smul.addr %s453, 8
      %s455 = scalar_lea.vmem %s1, %s454
      %s456 = smul.u32 16, %s27
      %p457 = scmp.lt.s32.totalorder %s27, 0
      %s458 = scalar_select %p457, %s27, 0
      %s459 = scalar_lea.vmem %s2, %s458
      %s460 = smul.u32 16, %s27
      %p461 = scmp.lt.s32.totalorder %s460, 15
      %s462 = scalar_select %p461, %s460, 15
      %s463 = smul.addr %s462, 8
      %s464 = scalar_lea.vmem %s3, %s463
      %s465 = smul.u32 16, %s27
      %s466 = smul.u32 16, %s27
      %p467 = scmp.lt.s32.totalorder %s466, 15
      %s468 = scalar_select %p467, %s466, 15
      %s469 = smul.addr %s468, 8
      %s470 = scalar_lea.vmem %s4, %s469
      %s471 = smul.u32 16, %s27
      %p472 = scmp.lt.s32.totalorder %s26, 2
      %s473 = scalar_select %p472, %s26, 2
      %s474 = smul.addr %s473, 2
      %s475 = smul.addr %s474, 4
      %s476 = scalar_lea.vmem %s5, %s475
      %p477 = scmp.lt.s32.totalorder %s26, 2
      %s478 = scalar_select %p477, %s26, 2
      %s479 = smul.addr %s478, 2
      %s480 = scalar_lea.vmem %s6, %s479
      %p481 = scmp.lt.s32.totalorder %s26, 2
      %s482 = scalar_select %p481, %s26, 2
      %s483 = smul.addr %s482, 2
      %s484 = smul.addr %s483, 8
      %s485 = scalar_lea.vmem %s7, %s484
      %p486 = scmp.lt.s32.totalorder %s26, 2
      %s487 = scalar_select %p486, %s26, 2
      %s488 = scalar_lea.vmem %s8, %s487
      %p489 = scmp.eq.s32.totalorder %s26, 0
      %p490 = scmp.eq.s32.totalorder %s27, 0
      %p491 = pnand %p489, %p490
      %p492 = pneg %p491
      // Predicated region
      $region61: #{tpu_custom_call.1} parent=59 // pred_check
        _
      $region62: #{tpu_custom_call.1} parent=59 // pred_check_branch
        %494 = sbr.rel (%p491) target = $region64
      $region63: #{tpu_custom_call.1} parent=59 // pred_region
        %p496 = scmp.lt.u32.totalorder 128, 8
        %p497 = pneg %p496
        // Predicated region
        $region65: #{tpu_custom_call.1} parent=63 // pred_check
          _
        $region66: #{tpu_custom_call.1} parent=63 // pred_check_branch
          %499 = sbr.rel (%p496) target = $region68
        $region67: #{tpu_custom_call.1} parent=63 // pred_region
          %s514 = sand.u32 128, 7
          %p515 = scmp.eq.s32.totalorder %s514, 0
          // Predicated region
          $region80: #{tpu_custom_call.1} parent=67 // pred_check
            %p516 = pneg %p515
          $region81: #{tpu_custom_call.1} parent=67 // pred_check_branch
            %518 = sbr.rel (%p516) target = $region83
          $region82: #{tpu_custom_call.1} parent=67 // pred_region
            loop: start=0, step=1, limit=1
            $region84: #{tpu_custom_call.1} parent=82 // loop_pre_header
              _
            $region85: #{tpu_custom_call.1} parent=82 // loop_header
              %s520 = sphi 0, %s524
              %p521 = scmp.ge.s32.totalorder %s520, 1
              %s525 = sphi %s0, %s0
              %s526 = sphi [#allocation2], [#allocation2]
            $region86: #{tpu_custom_call.1} parent=82 // loop_header_branch
              %523 = sbr.rel (%p521) target = $region90
            $region87: #{tpu_custom_call.1} parent=82 // loop_body
              %v527 = vld [vmem:[%s525] sm:$0xff]
              %528 = vst [vmem:[%s526] sm:$0xff] %v527
              %v529 = vld [vmem:[%s525 + $0x8] sm:$0xff]
              %530 = vst [vmem:[%s526 + $0x8] sm:$0xff] %v529
              %v531 = vld [vmem:[%s525 + $0x10] sm:$0xff]
              %532 = vst [vmem:[%s526 + $0x10] sm:$0xff] %v531
              %v533 = vld [vmem:[%s525 + $0x18] sm:$0xff]
              %534 = vst [vmem:[%s526 + $0x18] sm:$0xff] %v533
              %v535 = vld [vmem:[%s525 + $0x20] sm:$0xff]
              %536 = vst [vmem:[%s526 + $0x20] sm:$0xff] %v535
              %v537 = vld [vmem:[%s525 + $0x28] sm:$0xff]
              %538 = vst [vmem:[%s526 + $0x28] sm:$0xff] %v537
              %v539 = vld [vmem:[%s525 + $0x30] sm:$0xff]
              %540 = vst [vmem:[%s526 + $0x30] sm:$0xff] %v539
              %v541 = vld [vmem:[%s525 + $0x38] sm:$0xff]
              %542 = vst [vmem:[%s526 + $0x38] sm:$0xff] %v541
              %v543 = vld [vmem:[%s525 + $0x40] sm:$0xff]
              %544 = vst [vmem:[%s526 + $0x40] sm:$0xff] %v543
              %v545 = vld [vmem:[%s525 + $0x48] sm:$0xff]
              %546 = vst [vmem:[%s526 + $0x48] sm:$0xff] %v545
              %v547 = vld [vmem:[%s525 + $0x50] sm:$0xff]
              %548 = vst [vmem:[%s526 + $0x50] sm:$0xff] %v547
              %v549 = vld [vmem:[%s525 + $0x58] sm:$0xff]
              %550 = vst [vmem:[%s526 + $0x58] sm:$0xff] %v549
              %v551 = vld [vmem:[%s525 + $0x60] sm:$0xff]
              %552 = vst [vmem:[%s526 + $0x60] sm:$0xff] %v551
              %v553 = vld [vmem:[%s525 + $0x68] sm:$0xff]
              %554 = vst [vmem:[%s526 + $0x68] sm:$0xff] %v553
              %v555 = vld [vmem:[%s525 + $0x70] sm:$0xff]
              %556 = vst [vmem:[%s526 + $0x70] sm:$0xff] %v555
              %v557 = vld [vmem:[%s525 + $0x78] sm:$0xff]
              %558 = vst [vmem:[%s526 + $0x78] sm:$0xff] %v557
            $region88: #{tpu_custom_call.1} parent=82 // loop_footer
              %s524 = sadd.s32 1, %s520
            $region89: #{tpu_custom_call.1} parent=82 // loop_footer_branch
              %519 = sbr.rel target = $region85
            $region90: #{tpu_custom_call.1} parent=82 // loop_exit
              _
          $region83: #{tpu_custom_call.1} parent=67 // pred_fallthru
            _
          %p559 = pneg %p515
          // Predicated region
          $region91: #{tpu_custom_call.1} parent=67 // pred_check
            _
          $region92: #{tpu_custom_call.1} parent=67 // pred_check_branch
            %561 = sbr.rel (%p515) target = $region94
          $region93: #{tpu_custom_call.1} parent=67 // pred_region
            %s562 = sand.u32 128, 7
          $region94: #{tpu_custom_call.1} parent=67 // pred_fallthru
            _
        $region68: #{tpu_custom_call.1} parent=63 // pred_fallthru
          _
        // Predicated region
        $region69: #{tpu_custom_call.1} parent=63 // pred_check
          %p500 = pneg %p496
        $region70: #{tpu_custom_call.1} parent=63 // pred_check_branch
          %502 = sbr.rel (%p500) target = $region72
        $region71: #{tpu_custom_call.1} parent=63 // pred_region
          %s503 = sshllo.u32 0, 128
          loop: start=0, step=1, limit=1
          $region73: #{tpu_custom_call.1} parent=71 // loop_pre_header
            _
          $region74: #{tpu_custom_call.1} parent=71 // loop_header
            %s505 = sphi 0, %s509
            %p506 = scmp.ge.s32.totalorder %s505, 1
            %s510 = sphi %s0, %s0
            %s511 = sphi [#allocation2], [#allocation2]
          $region75: #{tpu_custom_call.1} parent=71 // loop_header_branch
            %508 = sbr.rel (%p506) target = $region79
          $region76: #{tpu_custom_call.1} parent=71 // loop_body
            %v512 = vld [vmem:[%s510] sm:%s503]
            %513 = vst [vmem:[%s511] sm:%s503] %v512
          $region77: #{tpu_custom_call.1} parent=71 // loop_footer
            %s509 = sadd.s32 1, %s505
          $region78: #{tpu_custom_call.1} parent=71 // loop_footer_branch
            %504 = sbr.rel target = $region74
          $region79: #{tpu_custom_call.1} parent=71 // loop_exit
            _
        $region72: #{tpu_custom_call.1} parent=63 // pred_fallthru
          _
        // Predicated region
        $region95: #{tpu_custom_call.1} parent=63 // pred_check
          _
        $region96: #{tpu_custom_call.1} parent=63 // pred_check_branch
          %565 = sbr.rel (0) target = $region98
        $region97: #{tpu_custom_call.1} parent=63 // pred_region
          %566 = vsyncadd [#allocation4], 2048
        $region98: #{tpu_custom_call.1} parent=63 // pred_fallthru
          _
        %s567 = smul.u32 128, 1
        %s568 = sshll.u32 %s567, 4
        %569 = dma.done [#allocation4], %s568
      $region64: #{tpu_custom_call.1} parent=59 // pred_fallthru
        _
      // Predicated region
      $region99: #{tpu_custom_call.1} parent=59 // pred_check
        %p570 = pneg %p490
      $region100: #{tpu_custom_call.1} parent=59 // pred_check_branch
        %572 = sbr.rel (%p570) target = $region102
      $region101: #{tpu_custom_call.1} parent=59 // pred_region
        %vm573 = vcmask 130048
        %574 = vst.msk [vmem:[#allocation3] sm:$0xff] %vm573, 0.0
        %575 = vst.msk [vmem:[#allocation3 + $0x8] sm:$0xff] %vm573, 0.0
        %576 = vst.msk [vmem:[#allocation3 + $0x10] sm:$0xff] %vm573, 0.0
        %577 = vst.msk [vmem:[#allocation3 + $0x18] sm:$0xff] %vm573, 0.0
        %578 = vst.msk [vmem:[#allocation3 + $0x20] sm:$0xff] %vm573, 0.0
        %579 = vst.msk [vmem:[#allocation3 + $0x28] sm:$0xff] %vm573, 0.0
        %580 = vst.msk [vmem:[#allocation3 + $0x30] sm:$0xff] %vm573, 0.0
        %581 = vst.msk [vmem:[#allocation3 + $0x38] sm:$0xff] %vm573, 0.0
        %582 = vst.msk [vmem:[#allocation3 + $0x40] sm:$0xff] %vm573, 0.0
        %583 = vst.msk [vmem:[#allocation3 + $0x48] sm:$0xff] %vm573, 0.0
        %584 = vst.msk [vmem:[#allocation3 + $0x50] sm:$0xff] %vm573, 0.0
        %585 = vst.msk [vmem:[#allocation3 + $0x58] sm:$0xff] %vm573, 0.0
        %586 = vst.msk [vmem:[#allocation3 + $0x60] sm:$0xff] %vm573, 0.0
        %587 = vst.msk [vmem:[#allocation3 + $0x68] sm:$0xff] %vm573, 0.0
        %588 = vst.msk [vmem:[#allocation3 + $0x70] sm:$0xff] %vm573, 0.0
        %589 = vst.msk [vmem:[#allocation3 + $0x78] sm:$0xff] %vm573, 0.0
      $region102: #{tpu_custom_call.1} parent=59 // pred_fallthru
        _
      %v590 = vld [vmem:[%s470] sm:$0xff]
      %v591 = vld [vmem:[%s470 + $0x8] sm:$0xff]
      %v592 = vld [vmem:[%s470 + $0x10] sm:$0xff]
      %v593 = vld [vmem:[%s470 + $0x18] sm:$0xff]
      %v594 = vld [vmem:[%s470 + $0x20] sm:$0xff]
      %v595 = vld [vmem:[%s470 + $0x28] sm:$0xff]
      %v596 = vld [vmem:[%s470 + $0x30] sm:$0xff]
      %v597 = vld [vmem:[%s470 + $0x38] sm:$0xff]
      %v598 = vld [vmem:[%s470 + $0x40] sm:$0xff]
      %v599 = vld [vmem:[%s470 + $0x48] sm:$0xff]
      %v600 = vld [vmem:[%s470 + $0x50] sm:$0xff]
      %v601 = vld [vmem:[%s470 + $0x58] sm:$0xff]
      %v602 = vld [vmem:[%s470 + $0x60] sm:$0xff]
      %v603 = vld [vmem:[%s470 + $0x68] sm:$0xff]
      %v604 = vld [vmem:[%s470 + $0x70] sm:$0xff]
      %v605 = vld [vmem:[%s470 + $0x78] sm:$0xff]
      %v606 = vld [vmem:[%s476] sm:$0x77]
      %v607 = vld [vmem:[%s480] sm:$0x3]
      %609 = vset.pattern.permute.xlu0 0
      %610 = vperm.xlu0 %609, %v590
      %v611 = vpop.permute.xlu0 %610
      %614 = vset.pattern.permute.xlu0 0
      %615 = vperm.xlu0 %614, %v591
      %v616 = vpop.permute.xlu0 %615
      %619 = vset.pattern.permute.xlu0 0
      %620 = vperm.xlu0 %619, %v592
      %v621 = vpop.permute.xlu0 %620
      %624 = vset.pattern.permute.xlu0 0
      %625 = vperm.xlu0 %624, %v593
      %v626 = vpop.permute.xlu0 %625
      %629 = vset.pattern.permute.xlu0 0
      %630 = vperm.xlu0 %629, %v594
      %v631 = vpop.permute.xlu0 %630
      %634 = vset.pattern.permute.xlu0 0
      %635 = vperm.xlu0 %634, %v595
      %v636 = vpop.permute.xlu0 %635
      %639 = vset.pattern.permute.xlu0 0
      %640 = vperm.xlu0 %639, %v596
      %v641 = vpop.permute.xlu0 %640
      %644 = vset.pattern.permute.xlu0 0
      %645 = vperm.xlu0 %644, %v597
      %v646 = vpop.permute.xlu0 %645
      %649 = vset.pattern.permute.xlu0 0
      %650 = vperm.xlu0 %649, %v598
      %v651 = vpop.permute.xlu0 %650
      %654 = vset.pattern.permute.xlu0 0
      %655 = vperm.xlu0 %654, %v599
      %v656 = vpop.permute.xlu0 %655
      %659 = vset.pattern.permute.xlu0 0
      %660 = vperm.xlu0 %659, %v600
      %v661 = vpop.permute.xlu0 %660
      %664 = vset.pattern.permute.xlu0 0
      %665 = vperm.xlu0 %664, %v601
      %v666 = vpop.permute.xlu0 %665
      %669 = vset.pattern.permute.xlu0 0
      %670 = vperm.xlu0 %669, %v602
      %v671 = vpop.permute.xlu0 %670
      %674 = vset.pattern.permute.xlu0 0
      %675 = vperm.xlu0 %674, %v603
      %v676 = vpop.permute.xlu0 %675
      %679 = vset.pattern.permute.xlu0 0
      %680 = vperm.xlu0 %679, %v604
      %v681 = vpop.permute.xlu0 %680
      %684 = vset.pattern.permute.xlu0 0
      %685 = vperm.xlu0 %684, %v605
      %v686 = vpop.permute.xlu0 %685
      %v689 = vlaneseq
      %v690 = vshrl.u32 %v689, 7
      %v691 = vsub.s32 0, %v690
      %v692 = vrot.slane %v606, %v691
      %v693 = vlaneseq
      %v694 = vshrl.u32 %v693, 7
      %v695 = vsub.s32 4, %v694
      %v696 = vrot.slane %v606, %v695
      %v699 = vlaneseq
      %v700 = vshrl.u32 %v699, 7
      %v701 = vsub.s32 0, %v700
      %v702 = vrot.slane %v692, %v701
      %v703 = vlaneseq
      %v704 = vshrl.u32 %v703, 7
      %v705 = vsub.s32 0, %v704
      %v706 = vrot.slane %v696, %v705
      %v707 = vmul.f32 %v611, %v702
      %v708 = vmul.f32 %v611, %v706
      %v709 = vmul.f32 %v616, %v702
      %v710 = vmul.f32 %v616, %v706
      %v711 = vmul.f32 %v621, %v702
      %v712 = vmul.f32 %v621, %v706
      %v713 = vmul.f32 %v626, %v702
      %v714 = vmul.f32 %v626, %v706
      %v715 = vmul.f32 %v631, %v702
      %v716 = vmul.f32 %v631, %v706
      %v717 = vmul.f32 %v636, %v702
      %v718 = vmul.f32 %v636, %v706
      %v719 = vmul.f32 %v641, %v702
      %v720 = vmul.f32 %v641, %v706
      %v721 = vmul.f32 %v646, %v702
      %v722 = vmul.f32 %v646, %v706
      %v723 = vmul.f32 %v651, %v702
      %v724 = vmul.f32 %v651, %v706
      %v725 = vmul.f32 %v656, %v702
      %v726 = vmul.f32 %v656, %v706
      %v727 = vmul.f32 %v661, %v702
      %v728 = vmul.f32 %v661, %v706
      %v729 = vmul.f32 %v666, %v702
      %v730 = vmul.f32 %v666, %v706
      %v731 = vmul.f32 %v671, %v702
      %v732 = vmul.f32 %v671, %v706
      %v733 = vmul.f32 %v676, %v702
      %v734 = vmul.f32 %v676, %v706
      %v735 = vmul.f32 %v681, %v702
      %v736 = vmul.f32 %v681, %v706
      %v737 = vmul.f32 %v686, %v702
      %v738 = vmul.f32 %v686, %v706
      %v740 = vlaneseq
      %v741 = vshrl.u32 %v740, 7
      %v742 = vsub.s32 0, %v741
      %v743 = vrot.slane %v607, %v742
      %v744 = vlaneseq
      %v745 = vshrl.u32 %v744, 7
      %v746 = vsub.s32 1, %v745
      %v747 = vrot.slane %v607, %v746
      %v750 = vadd.f32 %v743, %v707
      %v751 = vadd.f32 %v747, %v708
      %v752 = vadd.f32 %v743, %v709
      %v753 = vadd.f32 %v747, %v710
      %v754 = vadd.f32 %v743, %v711
      %v755 = vadd.f32 %v747, %v712
      %v756 = vadd.f32 %v743, %v713
      %v757 = vadd.f32 %v747, %v714
      %v758 = vadd.f32 %v743, %v715
      %v759 = vadd.f32 %v747, %v716
      %v760 = vadd.f32 %v743, %v717
      %v761 = vadd.f32 %v747, %v718
      %v762 = vadd.f32 %v743, %v719
      %v763 = vadd.f32 %v747, %v720
      %v764 = vadd.f32 %v743, %v721
      %v765 = vadd.f32 %v747, %v722
      %v766 = vadd.f32 %v743, %v723
      %v767 = vadd.f32 %v747, %v724
      %v768 = vadd.f32 %v743, %v725
      %v769 = vadd.f32 %v747, %v726
      %v770 = vadd.f32 %v743, %v727
      %v771 = vadd.f32 %v747, %v728
      %v772 = vadd.f32 %v743, %v729
      %v773 = vadd.f32 %v747, %v730
      %v774 = vadd.f32 %v743, %v731
      %v775 = vadd.f32 %v747, %v732
      %v776 = vadd.f32 %v743, %v733
      %v777 = vadd.f32 %v747, %v734
      %v778 = vadd.f32 %v743, %v735
      %v779 = vadd.f32 %v747, %v736
      %v780 = vadd.f32 %v743, %v737
      %v781 = vadd.f32 %v747, %v738
      %782 = vset.pattern.permute.xlu0 1
      %783 = vperm.xlu0 %782, %v590
      %v784 = vpop.permute.xlu0 %783
      %786 = vset.pattern.permute.xlu0 1
      %787 = vperm.xlu0 %786, %v591
      %v788 = vpop.permute.xlu0 %787
      %790 = vset.pattern.permute.xlu0 1
      %791 = vperm.xlu0 %790, %v592
      %v792 = vpop.permute.xlu0 %791
      %794 = vset.pattern.permute.xlu0 1
      %795 = vperm.xlu0 %794, %v593
      %v796 = vpop.permute.xlu0 %795
      %798 = vset.pattern.permute.xlu0 1
      %799 = vperm.xlu0 %798, %v594
      %v800 = vpop.permute.xlu0 %799
      %802 = vset.pattern.permute.xlu0 1
      %803 = vperm.xlu0 %802, %v595
      %v804 = vpop.permute.xlu0 %803
      %806 = vset.pattern.permute.xlu0 1
      %807 = vperm.xlu0 %806, %v596
      %v808 = vpop.permute.xlu0 %807
      %810 = vset.pattern.permute.xlu0 1
      %811 = vperm.xlu0 %810, %v597
      %v812 = vpop.permute.xlu0 %811
      %814 = vset.pattern.permute.xlu0 1
      %815 = vperm.xlu0 %814, %v598
      %v816 = vpop.permute.xlu0 %815
      %818 = vset.pattern.permute.xlu0 1
      %819 = vperm.xlu0 %818, %v599
      %v820 = vpop.permute.xlu0 %819
      %822 = vset.pattern.permute.xlu0 1
      %823 = vperm.xlu0 %822, %v600
      %v824 = vpop.permute.xlu0 %823
      %826 = vset.pattern.permute.xlu0 1
      %827 = vperm.xlu0 %826, %v601
      %v828 = vpop.permute.xlu0 %827
      %830 = vset.pattern.permute.xlu0 1
      %831 = vperm.xlu0 %830, %v602
      %v832 = vpop.permute.xlu0 %831
      %834 = vset.pattern.permute.xlu0 1
      %835 = vperm.xlu0 %834, %v603
      %v836 = vpop.permute.xlu0 %835
      %838 = vset.pattern.permute.xlu0 1
      %839 = vperm.xlu0 %838, %v604
      %v840 = vpop.permute.xlu0 %839
      %842 = vset.pattern.permute.xlu0 1
      %843 = vperm.xlu0 %842, %v605
      %v844 = vpop.permute.xlu0 %843
      %v846 = vlaneseq
      %v847 = vshrl.u32 %v846, 7
      %v848 = vsub.s32 1, %v847
      %v849 = vrot.slane %v606, %v848
      %v850 = vlaneseq
      %v851 = vshrl.u32 %v850, 7
      %v852 = vsub.s32 5, %v851
      %v853 = vrot.slane %v606, %v852
      %v856 = vlaneseq
      %v857 = vshrl.u32 %v856, 7
      %v858 = vsub.s32 1, %v857
      %v859 = vrot.slane %v849, %v858
      %v860 = vlaneseq
      %v861 = vshrl.u32 %v860, 7
      %v862 = vsub.s32 1, %v861
      %v863 = vrot.slane %v853, %v862
      %v864 = vmul.f32 %v784, %v859
      %v865 = vmul.f32 %v784, %v863
      %v866 = vmul.f32 %v788, %v859
      %v867 = vmul.f32 %v788, %v863
      %v868 = vmul.f32 %v792, %v859
      %v869 = vmul.f32 %v792, %v863
      %v870 = vmul.f32 %v796, %v859
      %v871 = vmul.f32 %v796, %v863
      %v872 = vmul.f32 %v800, %v859
      %v873 = vmul.f32 %v800, %v863
      %v874 = vmul.f32 %v804, %v859
      %v875 = vmul.f32 %v804, %v863
      %v876 = vmul.f32 %v808, %v859
      %v877 = vmul.f32 %v808, %v863
      %v878 = vmul.f32 %v812, %v859
      %v879 = vmul.f32 %v812, %v863
      %v880 = vmul.f32 %v816, %v859
      %v881 = vmul.f32 %v816, %v863
      %v882 = vmul.f32 %v820, %v859
      %v883 = vmul.f32 %v820, %v863
      %v884 = vmul.f32 %v824, %v859
      %v885 = vmul.f32 %v824, %v863
      %v886 = vmul.f32 %v828, %v859
      %v887 = vmul.f32 %v828, %v863
      %v888 = vmul.f32 %v832, %v859
      %v889 = vmul.f32 %v832, %v863
      %v890 = vmul.f32 %v836, %v859
      %v891 = vmul.f32 %v836, %v863
      %v892 = vmul.f32 %v840, %v859
      %v893 = vmul.f32 %v840, %v863
      %v894 = vmul.f32 %v844, %v859
      %v895 = vmul.f32 %v844, %v863
      %v896 = vadd.f32 %v750, %v864
      %v897 = vadd.f32 %v751, %v865
      %v898 = vadd.f32 %v752, %v866
      %v899 = vadd.f32 %v753, %v867
      %v900 = vadd.f32 %v754, %v868
      %v901 = vadd.f32 %v755, %v869
      %v902 = vadd.f32 %v756, %v870
      %v903 = vadd.f32 %v757, %v871
      %v904 = vadd.f32 %v758, %v872
      %v905 = vadd.f32 %v759, %v873
      %v906 = vadd.f32 %v760, %v874
      %v907 = vadd.f32 %v761, %v875
      %v908 = vadd.f32 %v762, %v876
      %v909 = vadd.f32 %v763, %v877
      %v910 = vadd.f32 %v764, %v878
      %v911 = vadd.f32 %v765, %v879
      %v912 = vadd.f32 %v766, %v880
      %v913 = vadd.f32 %v767, %v881
      %v914 = vadd.f32 %v768, %v882
      %v915 = vadd.f32 %v769, %v883
      %v916 = vadd.f32 %v770, %v884
      %v917 = vadd.f32 %v771, %v885
      %v918 = vadd.f32 %v772, %v886
      %v919 = vadd.f32 %v773, %v887
      %v920 = vadd.f32 %v774, %v888
      %v921 = vadd.f32 %v775, %v889
      %v922 = vadd.f32 %v776, %v890
      %v923 = vadd.f32 %v777, %v891
      %v924 = vadd.f32 %v778, %v892
      %v925 = vadd.f32 %v779, %v893
      %v926 = vadd.f32 %v780, %v894
      %v927 = vadd.f32 %v781, %v895
      %928 = vset.pattern.permute.xlu0 2
      %929 = vperm.xlu0 %928, %v590
      %v930 = vpop.permute.xlu0 %929
      %932 = vset.pattern.permute.xlu0 2
      %933 = vperm.xlu0 %932, %v591
      %v934 = vpop.permute.xlu0 %933
      %936 = vset.pattern.permute.xlu0 2
      %937 = vperm.xlu0 %936, %v592
      %v938 = vpop.permute.xlu0 %937
      %940 = vset.pattern.permute.xlu0 2
      %941 = vperm.xlu0 %940, %v593
      %v942 = vpop.permute.xlu0 %941
      %944 = vset.pattern.permute.xlu0 2
      %945 = vperm.xlu0 %944, %v594
      %v946 = vpop.permute.xlu0 %945
      %948 = vset.pattern.permute.xlu0 2
      %949 = vperm.xlu0 %948, %v595
      %v950 = vpop.permute.xlu0 %949
      %952 = vset.pattern.permute.xlu0 2
      %953 = vperm.xlu0 %952, %v596
      %v954 = vpop.permute.xlu0 %953
      %956 = vset.pattern.permute.xlu0 2
      %957 = vperm.xlu0 %956, %v597
      %v958 = vpop.permute.xlu0 %957
      %960 = vset.pattern.permute.xlu0 2
      %961 = vperm.xlu0 %960, %v598
      %v962 = vpop.permute.xlu0 %961
      %964 = vset.pattern.permute.xlu0 2
      %965 = vperm.xlu0 %964, %v599
      %v966 = vpop.permute.xlu0 %965
      %968 = vset.pattern.permute.xlu0 2
      %969 = vperm.xlu0 %968, %v600
      %v970 = vpop.permute.xlu0 %969
      %972 = vset.pattern.permute.xlu0 2
      %973 = vperm.xlu0 %972, %v601
      %v974 = vpop.permute.xlu0 %973
      %976 = vset.pattern.permute.xlu0 2
      %977 = vperm.xlu0 %976, %v602
      %v978 = vpop.permute.xlu0 %977
      %980 = vset.pattern.permute.xlu0 2
      %981 = vperm.xlu0 %980, %v603
      %v982 = vpop.permute.xlu0 %981
      %984 = vset.pattern.permute.xlu0 2
      %985 = vperm.xlu0 %984, %v604
      %v986 = vpop.permute.xlu0 %985
      %988 = vset.pattern.permute.xlu0 2
      %989 = vperm.xlu0 %988, %v605
      %v990 = vpop.permute.xlu0 %989
      %v992 = vlaneseq
      %v993 = vshrl.u32 %v992, 7
      %v994 = vsub.s32 2, %v993
      %v995 = vrot.slane %v606, %v994
      %v996 = vlaneseq
      %v997 = vshrl.u32 %v996, 7
      %v998 = vsub.s32 6, %v997
      %v999 = vrot.slane %v606, %v998
      %v1002 = vlaneseq
      %v1003 = vshrl.u32 %v1002, 7
      %v1004 = vsub.s32 2, %v1003
      %v1005 = vrot.slane %v995, %v1004
      %v1006 = vlaneseq
      %v1007 = vshrl.u32 %v1006, 7
      %v1008 = vsub.s32 2, %v1007
      %v1009 = vrot.slane %v999, %v1008
      %v1010 = vmul.f32 %v930, %v1005
      %v1011 = vmul.f32 %v930, %v1009
      %v1012 = vmul.f32 %v934, %v1005
      %v1013 = vmul.f32 %v934, %v1009
      %v1014 = vmul.f32 %v938, %v1005
      %v1015 = vmul.f32 %v938, %v1009
      %v1016 = vmul.f32 %v942, %v1005
      %v1017 = vmul.f32 %v942, %v1009
      %v1018 = vmul.f32 %v946, %v1005
      %v1019 = vmul.f32 %v946, %v1009
      %v1020 = vmul.f32 %v950, %v1005
      %v1021 = vmul.f32 %v950, %v1009
      %v1022 = vmul.f32 %v954, %v1005
      %v1023 = vmul.f32 %v954, %v1009
      %v1024 = vmul.f32 %v958, %v1005
      %v1025 = vmul.f32 %v958, %v1009
      %v1026 = vmul.f32 %v962, %v1005
      %v1027 = vmul.f32 %v962, %v1009
      %v1028 = vmul.f32 %v966, %v1005
      %v1029 = vmul.f32 %v966, %v1009
      %v1030 = vmul.f32 %v970, %v1005
      %v1031 = vmul.f32 %v970, %v1009
      %v1032 = vmul.f32 %v974, %v1005
      %v1033 = vmul.f32 %v974, %v1009
      %v1034 = vmul.f32 %v978, %v1005
      %v1035 = vmul.f32 %v978, %v1009
      %v1036 = vmul.f32 %v982, %v1005
      %v1037 = vmul.f32 %v982, %v1009
      %v1038 = vmul.f32 %v986, %v1005
      %v1039 = vmul.f32 %v986, %v1009
      %v1040 = vmul.f32 %v990, %v1005
      %v1041 = vmul.f32 %v990, %v1009
      %v1042 = vadd.f32 %v896, %v1010
      %v1043 = vadd.f32 %v897, %v1011
      %v1044 = vadd.f32 %v898, %v1012
      %v1045 = vadd.f32 %v899, %v1013
      %v1046 = vadd.f32 %v900, %v1014
      %v1047 = vadd.f32 %v901, %v1015
      %v1048 = vadd.f32 %v902, %v1016
      %v1049 = vadd.f32 %v903, %v1017
      %v1050 = vadd.f32 %v904, %v1018
      %v1051 = vadd.f32 %v905, %v1019
      %v1052 = vadd.f32 %v906, %v1020
      %v1053 = vadd.f32 %v907, %v1021
      %v1054 = vadd.f32 %v908, %v1022
      %v1055 = vadd.f32 %v909, %v1023
      %v1056 = vadd.f32 %v910, %v1024
      %v1057 = vadd.f32 %v911, %v1025
      %v1058 = vadd.f32 %v912, %v1026
      %v1059 = vadd.f32 %v913, %v1027
      %v1060 = vadd.f32 %v914, %v1028
      %v1061 = vadd.f32 %v915, %v1029
      %v1062 = vadd.f32 %v916, %v1030
      %v1063 = vadd.f32 %v917, %v1031
      %v1064 = vadd.f32 %v918, %v1032
      %v1065 = vadd.f32 %v919, %v1033
      %v1066 = vadd.f32 %v920, %v1034
      %v1067 = vadd.f32 %v921, %v1035
      %v1068 = vadd.f32 %v922, %v1036
      %v1069 = vadd.f32 %v923, %v1037
      %v1070 = vadd.f32 %v924, %v1038
      %v1071 = vadd.f32 %v925, %v1039
      %v1072 = vadd.f32 %v926, %v1040
      %v1073 = vadd.f32 %v927, %v1041
      %v1074 = vmax.f32 %v1042, 0.0
      %v1075 = vmax.f32 %v1043, 0.0
      %v1076 = vmax.f32 %v1044, 0.0
      %v1077 = vmax.f32 %v1045, 0.0
      %v1078 = vmax.f32 %v1046, 0.0
      %v1079 = vmax.f32 %v1047, 0.0
      %v1080 = vmax.f32 %v1048, 0.0
      %v1081 = vmax.f32 %v1049, 0.0
      %v1082 = vmax.f32 %v1050, 0.0
      %v1083 = vmax.f32 %v1051, 0.0
      %v1084 = vmax.f32 %v1052, 0.0
      %v1085 = vmax.f32 %v1053, 0.0
      %v1086 = vmax.f32 %v1054, 0.0
      %v1087 = vmax.f32 %v1055, 0.0
      %v1088 = vmax.f32 %v1056, 0.0
      %v1089 = vmax.f32 %v1057, 0.0
      %v1090 = vmax.f32 %v1058, 0.0
      %v1091 = vmax.f32 %v1059, 0.0
      %v1092 = vmax.f32 %v1060, 0.0
      %v1093 = vmax.f32 %v1061, 0.0
      %v1094 = vmax.f32 %v1062, 0.0
      %v1095 = vmax.f32 %v1063, 0.0
      %v1096 = vmax.f32 %v1064, 0.0
      %v1097 = vmax.f32 %v1065, 0.0
      %v1098 = vmax.f32 %v1066, 0.0
      %v1099 = vmax.f32 %v1067, 0.0
      %v1100 = vmax.f32 %v1068, 0.0
      %v1101 = vmax.f32 %v1069, 0.0
      %v1102 = vmax.f32 %v1070, 0.0
      %v1103 = vmax.f32 %v1071, 0.0
      %v1104 = vmax.f32 %v1072, 0.0
      %v1105 = vmax.f32 %v1073, 0.0
      %v1106 = vlaneseq
      %v1107 = vand.u32 %v1106, 127
      %v1108 = vld [vmem:[%s455] sm:$0xff]
      %v1109 = vld [vmem:[%s455 + $0x8] sm:$0xff]
      %v1110 = vld [vmem:[%s455 + $0x10] sm:$0xff]
      %v1111 = vld [vmem:[%s455 + $0x18] sm:$0xff]
      %v1112 = vld [vmem:[%s455 + $0x20] sm:$0xff]
      %v1113 = vld [vmem:[%s455 + $0x28] sm:$0xff]
      %v1114 = vld [vmem:[%s455 + $0x30] sm:$0xff]
      %v1115 = vld [vmem:[%s455 + $0x38] sm:$0xff]
      %v1116 = vld [vmem:[%s455 + $0x40] sm:$0xff]
      %v1117 = vld [vmem:[%s455 + $0x48] sm:$0xff]
      %v1118 = vld [vmem:[%s455 + $0x50] sm:$0xff]
      %v1119 = vld [vmem:[%s455 + $0x58] sm:$0xff]
      %v1120 = vld [vmem:[%s455 + $0x60] sm:$0xff]
      %v1121 = vld [vmem:[%s455 + $0x68] sm:$0xff]
      %v1122 = vld [vmem:[%s455 + $0x70] sm:$0xff]
      %v1123 = vld [vmem:[%s455 + $0x78] sm:$0xff]
      %1124 = vset.pattern.permute.xlu0 0
      %1125 = vperm.xlu0 %1124, %v1108
      %v1126 = vpop.permute.xlu0 %1125
      %1127 = vset.pattern.permute.xlu0 0
      %1128 = vperm.xlu0 %1127, %v1109
      %v1129 = vpop.permute.xlu0 %1128
      %1130 = vset.pattern.permute.xlu0 0
      %1131 = vperm.xlu0 %1130, %v1110
      %v1132 = vpop.permute.xlu0 %1131
      %1133 = vset.pattern.permute.xlu0 0
      %1134 = vperm.xlu0 %1133, %v1111
      %v1135 = vpop.permute.xlu0 %1134
      %1136 = vset.pattern.permute.xlu0 0
      %1137 = vperm.xlu0 %1136, %v1112
      %v1138 = vpop.permute.xlu0 %1137
      %1139 = vset.pattern.permute.xlu0 0
      %1140 = vperm.xlu0 %1139, %v1113
      %v1141 = vpop.permute.xlu0 %1140
      %1142 = vset.pattern.permute.xlu0 0
      %1143 = vperm.xlu0 %1142, %v1114
      %v1144 = vpop.permute.xlu0 %1143
      %1145 = vset.pattern.permute.xlu0 0
      %1146 = vperm.xlu0 %1145, %v1115
      %v1147 = vpop.permute.xlu0 %1146
      %1148 = vset.pattern.permute.xlu0 0
      %1149 = vperm.xlu0 %1148, %v1116
      %v1150 = vpop.permute.xlu0 %1149
      %1151 = vset.pattern.permute.xlu0 0
      %1152 = vperm.xlu0 %1151, %v1117
      %v1153 = vpop.permute.xlu0 %1152
      %1154 = vset.pattern.permute.xlu0 0
      %1155 = vperm.xlu0 %1154, %v1118
      %v1156 = vpop.permute.xlu0 %1155
      %1157 = vset.pattern.permute.xlu0 0
      %1158 = vperm.xlu0 %1157, %v1119
      %v1159 = vpop.permute.xlu0 %1158
      %1160 = vset.pattern.permute.xlu0 0
      %1161 = vperm.xlu0 %1160, %v1120
      %v1162 = vpop.permute.xlu0 %1161
      %1163 = vset.pattern.permute.xlu0 0
      %1164 = vperm.xlu0 %1163, %v1121
      %v1165 = vpop.permute.xlu0 %1164
      %1166 = vset.pattern.permute.xlu0 0
      %1167 = vperm.xlu0 %1166, %v1122
      %v1168 = vpop.permute.xlu0 %1167
      %1169 = vset.pattern.permute.xlu0 0
      %1170 = vperm.xlu0 %1169, %v1123
      %v1171 = vpop.permute.xlu0 %1170
      %vm1172 = vcmp.eq.s32.totalorder %v1126, %v1107
      %vm1173 = vcmp.eq.s32.totalorder %v1129, %v1107
      %vm1174 = vcmp.eq.s32.totalorder %v1132, %v1107
      %vm1175 = vcmp.eq.s32.totalorder %v1135, %v1107
      %vm1176 = vcmp.eq.s32.totalorder %v1138, %v1107
      %vm1177 = vcmp.eq.s32.totalorder %v1141, %v1107
      %vm1178 = vcmp.eq.s32.totalorder %v1144, %v1107
      %vm1179 = vcmp.eq.s32.totalorder %v1147, %v1107
      %vm1180 = vcmp.eq.s32.totalorder %v1150, %v1107
      %vm1181 = vcmp.eq.s32.totalorder %v1153, %v1107
      %vm1182 = vcmp.eq.s32.totalorder %v1156, %v1107
      %vm1183 = vcmp.eq.s32.totalorder %v1159, %v1107
      %vm1184 = vcmp.eq.s32.totalorder %v1162, %v1107
      %vm1185 = vcmp.eq.s32.totalorder %v1165, %v1107
      %vm1186 = vcmp.eq.s32.totalorder %v1168, %v1107
      %vm1187 = vcmp.eq.s32.totalorder %v1171, %v1107
      %v1188 = vsel %vm1172, 1.0, 0.0
      %v1189 = vsel %vm1173, 1.0, 0.0
      %v1190 = vsel %vm1174, 1.0, 0.0
      %v1191 = vsel %vm1175, 1.0, 0.0
      %v1192 = vsel %vm1176, 1.0, 0.0
      %v1193 = vsel %vm1177, 1.0, 0.0
      %v1194 = vsel %vm1178, 1.0, 0.0
      %v1195 = vsel %vm1179, 1.0, 0.0
      %v1196 = vsel %vm1180, 1.0, 0.0
      %v1197 = vsel %vm1181, 1.0, 0.0
      %v1198 = vsel %vm1182, 1.0, 0.0
      %v1199 = vsel %vm1183, 1.0, 0.0
      %v1200 = vsel %vm1184, 1.0, 0.0
      %v1201 = vsel %vm1185, 1.0, 0.0
      %v1202 = vsel %vm1186, 1.0, 0.0
      %v1203 = vsel %vm1187, 1.0, 0.0
      %v1204 = vld [vmem:[#allocation2] sm:$0xff]
      %v1205 = vld [vmem:[#allocation2 + $0x8] sm:$0xff]
      %v1206 = vld [vmem:[#allocation2 + $0x10] sm:$0xff]
      %v1207 = vld [vmem:[#allocation2 + $0x18] sm:$0xff]
      %v1208 = vld [vmem:[#allocation2 + $0x20] sm:$0xff]
      %v1209 = vld [vmem:[#allocation2 + $0x28] sm:$0xff]
      %v1210 = vld [vmem:[#allocation2 + $0x30] sm:$0xff]
      %v1211 = vld [vmem:[#allocation2 + $0x38] sm:$0xff]
      %v1212 = vld [vmem:[#allocation2 + $0x40] sm:$0xff]
      %v1213 = vld [vmem:[#allocation2 + $0x48] sm:$0xff]
      %v1214 = vld [vmem:[#allocation2 + $0x50] sm:$0xff]
      %v1215 = vld [vmem:[#allocation2 + $0x58] sm:$0xff]
      %v1216 = vld [vmem:[#allocation2 + $0x60] sm:$0xff]
      %v1217 = vld [vmem:[#allocation2 + $0x68] sm:$0xff]
      %v1218 = vld [vmem:[#allocation2 + $0x70] sm:$0xff]
      %v1219 = vld [vmem:[#allocation2 + $0x78] sm:$0xff]
      %1220 = vmatprep.subr.mxu0 0.0
      %1221 = vmatpush1.msra.mxu0 %v1204
      %1222 = vmatprep.subr.mxu0 0.0
      %1223 = vmatpush1.msra.mxu0 %v1205
      %1224 = vmatprep.subr.mxu0 0.0
      %1225 = vmatpush1.msra.mxu0 %v1206
      %1226 = vmatprep.subr.mxu0 0.0
      %1227 = vmatpush1.msra.mxu0 %v1207
      %1228 = vmatprep.subr.mxu0 0.0
      %1229 = vmatpush1.msra.mxu0 %v1208
      %1230 = vmatprep.subr.mxu0 0.0
      %1231 = vmatpush1.msra.mxu0 %v1209
      %1232 = vmatprep.subr.mxu0 0.0
      %1233 = vmatpush1.msra.mxu0 %v1210
      %1234 = vmatprep.subr.mxu0 0.0
      %1235 = vmatpush1.msra.mxu0 %v1211
      %1236 = vmatprep.subr.mxu0 0.0
      %1237 = vmatpush1.msra.mxu0 %v1212
      %1238 = vmatprep.subr.mxu0 0.0
      %1239 = vmatpush1.msra.mxu0 %v1213
      %1240 = vmatprep.subr.mxu0 0.0
      %1241 = vmatpush1.msra.mxu0 %v1214
      %1242 = vmatprep.subr.mxu0 0.0
      %1243 = vmatpush1.msra.mxu0 %v1215
      %1244 = vmatprep.subr.mxu0 0.0
      %1245 = vmatpush1.msra.mxu0 %v1216
      %1246 = vmatprep.subr.mxu0 0.0
      %1247 = vmatpush1.msra.mxu0 %v1217
      %1248 = vmatprep.subr.mxu0 0.0
      %1249 = vmatpush1.msra.mxu0 %v1218
      %1250 = vmatprep.subr.mxu0 0.0
      %1251 = vmatpush1.msra.mxu0 %v1219
      %1252 = vmatprep.subr.mxu0 0.0
      %1253 = vmatpush1.msra.mxu0 0.0
      %1254 = vmatprep.subr.mxu0 0.0
      %1255 = vmatpush1.msra.mxu0 0.0
      %1256 = vmatprep.subr.mxu0 0.0
      %1257 = vmatpush1.msra.mxu0 0.0
      %1258 = vmatprep.subr.mxu0 0.0
      %1259 = vmatpush1.msra.mxu0 0.0
      %1260 = vmatprep.subr.mxu0 0.0
      %1261 = vmatpush1.msra.mxu0 0.0
      %1262 = vmatprep.subr.mxu0 0.0
      %1263 = vmatpush1.msra.mxu0 0.0
      %1264 = vmatprep.subr.mxu0 0.0
      %1265 = vmatpush1.msra.mxu0 0.0
      %1266 = vmatprep.subr.mxu0 0.0
      %1267 = vmatpush1.msra.mxu0 0.0
      %1268 = vmatprep.subr.mxu0 0.0
      %1269 = vmatpush1.msra.mxu0 0.0
      %1270 = vmatprep.subr.mxu0 0.0
      %1271 = vmatpush1.msra.mxu0 0.0
      %1272 = vmatprep.subr.mxu0 0.0
      %1273 = vmatpush1.msra.mxu0 0.0
      %1274 = vmatprep.subr.mxu0 0.0
      %1275 = vmatpush1.msra.mxu0 0.0
      %1276 = vmatprep.subr.mxu0 0.0
      %1277 = vmatpush1.msra.mxu0 0.0
      %1278 = vmatprep.subr.mxu0 0.0
      %1279 = vmatpush1.msra.mxu0 0.0
      %1280 = vmatprep.subr.mxu0 0.0
      %1281 = vmatpush1.msra.mxu0 0.0
      %1282 = vmatprep.subr.mxu0 0.0
      %1283 = vmatpush1.msra.mxu0 0.0
      %1284 = vmatprep.mubr.f32.mxu0 0.0
      %1285 = vmatmul.mubr.f32.gmra.mrb[0].mxu0 %v1188
      %v1286 = vpop.f32.mrb[0].mxu0
      %v1287 = vadd.f32 0.0, %v1286
      %v1288 = vpop.f32.mrb[0].mxu0
      %1289 = vmatprep.mubr.f32.mxu0 0.0
      %1290 = vmatmul.mubr.f32.gmra.mrb[0].mxu0 %v1189
      %v1291 = vpop.f32.mrb[0].mxu0
      %v1292 = vadd.f32 0.0, %v1291
      %v1293 = vpop.f32.mrb[0].mxu0
      %1294 = vmatprep.mubr.f32.mxu0 0.0
      %1295 = vmatmul.mubr.f32.gmra.mrb[0].mxu0 %v1190
      %v1296 = vpop.f32.mrb[0].mxu0
      %v1297 = vadd.f32 0.0, %v1296
      %v1298 = vpop.f32.mrb[0].mxu0
      %1299 = vmatprep.mubr.f32.mxu0 0.0
      %1300 = vmatmul.mubr.f32.gmra.mrb[0].mxu0 %v1191
      %v1301 = vpop.f32.mrb[0].mxu0
      %v1302 = vadd.f32 0.0, %v1301
      %v1303 = vpop.f32.mrb[0].mxu0
      %1304 = vmatprep.mubr.f32.mxu0 0.0
      %1305 = vmatmul.mubr.f32.gmra.mrb[0].mxu0 %v1192
      %v1306 = vpop.f32.mrb[0].mxu0
      %v1307 = vadd.f32 0.0, %v1306
      %v1308 = vpop.f32.mrb[0].mxu0
      %1309 = vmatprep.mubr.f32.mxu0 0.0
      %1310 = vmatmul.mubr.f32.gmra.mrb[0].mxu0 %v1193
      %v1311 = vpop.f32.mrb[0].mxu0
      %v1312 = vadd.f32 0.0, %v1311
      %v1313 = vpop.f32.mrb[0].mxu0
      %1314 = vmatprep.mubr.f32.mxu0 0.0
      %1315 = vmatmul.mubr.f32.gmra.mrb[0].mxu0 %v1194
      %v1316 = vpop.f32.mrb[0].mxu0
      %v1317 = vadd.f32 0.0, %v1316
      %v1318 = vpop.f32.mrb[0].mxu0
      %1319 = vmatprep.mubr.f32.mxu0 0.0
      %1320 = vmatmul.mubr.f32.gmra.mrb[0].mxu0 %v1195
      %v1321 = vpop.f32.mrb[0].mxu0
      %v1322 = vadd.f32 0.0, %v1321
      %v1323 = vpop.f32.mrb[0].mxu0
      %1324 = vmatprep.mubr.f32.mxu0 0.0
      %1325 = vmatmul.mubr.f32.gmra.mrb[0].mxu0 %v1196
      %v1326 = vpop.f32.mrb[0].mxu0
      %v1327 = vadd.f32 0.0, %v1326
      %v1328 = vpop.f32.mrb[0].mxu0
      %1329 = vmatprep.mubr.f32.mxu0 0.0
      %1330 = vmatmul.mubr.f32.gmra.mrb[0].mxu0 %v1197
      %v1331 = vpop.f32.mrb[0].mxu0
      %v1332 = vadd.f32 0.0, %v1331
      %v1333 = vpop.f32.mrb[0].mxu0
      %1334 = vmatprep.mubr.f32.mxu0 0.0
      %1335 = vmatmul.mubr.f32.gmra.mrb[0].mxu0 %v1198
      %v1336 = vpop.f32.mrb[0].mxu0
      %v1337 = vadd.f32 0.0, %v1336
      %v1338 = vpop.f32.mrb[0].mxu0
      %1339 = vmatprep.mubr.f32.mxu0 0.0
      %1340 = vmatmul.mubr.f32.gmra.mrb[0].mxu0 %v1199
      %v1341 = vpop.f32.mrb[0].mxu0
      %v1342 = vadd.f32 0.0, %v1341
      %v1343 = vpop.f32.mrb[0].mxu0
      %1344 = vmatprep.mubr.f32.mxu0 0.0
      %1345 = vmatmul.mubr.f32.gmra.mrb[0].mxu0 %v1200
      %v1346 = vpop.f32.mrb[0].mxu0
      %v1347 = vadd.f32 0.0, %v1346
      %v1348 = vpop.f32.mrb[0].mxu0
      %1349 = vmatprep.mubr.f32.mxu0 0.0
      %1350 = vmatmul.mubr.f32.gmra.mrb[0].mxu0 %v1201
      %v1351 = vpop.f32.mrb[0].mxu0
      %v1352 = vadd.f32 0.0, %v1351
      %v1353 = vpop.f32.mrb[0].mxu0
      %1354 = vmatprep.mubr.f32.mxu0 0.0
      %1355 = vmatmul.mubr.f32.gmra.mrb[0].mxu0 %v1202
      %v1356 = vpop.f32.mrb[0].mxu0
      %v1357 = vadd.f32 0.0, %v1356
      %v1358 = vpop.f32.mrb[0].mxu0
      %1359 = vmatprep.mubr.f32.mxu0 0.0
      %1360 = vmatmul.mubr.f32.gmra.mrb[0].mxu0 %v1203
      %v1361 = vpop.f32.mrb[0].mxu0
      %v1362 = vadd.f32 0.0, %v1361
      %v1363 = vpop.f32.mrb[0].mxu0
      %1364 = vdwg.mxu0
      %v1365 = vld [vmem:[%s9] sm:$0xff]
      %v1366 = vld [vmem:[%s9 + $0x8] sm:$0xff]
      %v1367 = vld [vmem:[%s9 + $0x10] sm:$0xff]
      %v1368 = vld [vmem:[%s9 + $0x18] sm:$0xff]
      %vm1369 = vcmask 130048
      %v1371 = vsel %vm1369, %v1287, 0
      %v1374 = vsel %vm1369, %v1292, 0
      %v1377 = vsel %vm1369, %v1297, 0
      %v1380 = vsel %vm1369, %v1302, 0
      %v1383 = vsel %vm1369, %v1307, 0
      %v1386 = vsel %vm1369, %v1312, 0
      %v1389 = vsel %vm1369, %v1317, 0
      %v1392 = vsel %vm1369, %v1322, 0
      %v1395 = vsel %vm1369, %v1327, 0
      %v1398 = vsel %vm1369, %v1332, 0
      %v1401 = vsel %vm1369, %v1337, 0
      %v1404 = vsel %vm1369, %v1342, 0
      %v1407 = vsel %vm1369, %v1347, 0
      %v1410 = vsel %vm1369, %v1352, 0
      %v1413 = vsel %vm1369, %v1357, 0
      %v1416 = vsel %vm1369, %v1362, 0
      %1418 = vmatprep.subr.mxu0 %v1366
      %1419 = vmatpush1.msra.mxu0 %v1365
      %1420 = vmatprep.subr.mxu0 %v1368
      %1421 = vmatpush1.msra.mxu0 %v1367
      %1422 = vmatprep.subr.mxu0 0.0
      %1423 = vmatpush1.msra.mxu0 0.0
      %1424 = vmatprep.subr.mxu0 0.0
      %1425 = vmatpush1.msra.mxu0 0.0
      %1426 = vmatprep.subr.mxu0 0.0
      %1427 = vmatpush1.msra.mxu0 0.0
      %1428 = vmatprep.subr.mxu0 0.0
      %1429 = vmatpush1.msra.mxu0 0.0
      %1430 = vmatprep.subr.mxu0 0.0
      %1431 = vmatpush1.msra.mxu0 0.0
      %1432 = vmatprep.subr.mxu0 0.0
      %1433 = vmatpush1.msra.mxu0 0.0
      %1434 = vmatprep.subr.mxu0 0.0
      %1435 = vmatpush1.msra.mxu0 0.0
      %1436 = vmatprep.subr.mxu0 0.0
      %1437 = vmatpush1.msra.mxu0 0.0
      %1438 = vmatprep.subr.mxu0 0.0
      %1439 = vmatpush1.msra.mxu0 0.0
      %1440 = vmatprep.subr.mxu0 0.0
      %1441 = vmatpush1.msra.mxu0 0.0
      %1442 = vmatprep.subr.mxu0 0.0
      %1443 = vmatpush1.msra.mxu0 0.0
      %1444 = vmatprep.subr.mxu0 0.0
      %1445 = vmatpush1.msra.mxu0 0.0
      %1446 = vmatprep.subr.mxu0 0.0
      %1447 = vmatpush1.msra.mxu0 0.0
      %1448 = vmatprep.subr.mxu0 0.0
      %1449 = vmatpush1.msra.mxu0 0.0
      %1450 = vmatprep.subr.mxu0 0.0
      %1451 = vmatpush1.msra.mxu0 0.0
      %1452 = vmatprep.subr.mxu0 0.0
      %1453 = vmatpush1.msra.mxu0 0.0
      %1454 = vmatprep.subr.mxu0 0.0
      %1455 = vmatpush1.msra.mxu0 0.0
      %1456 = vmatprep.subr.mxu0 0.0
      %1457 = vmatpush1.msra.mxu0 0.0
      %1458 = vmatprep.subr.mxu0 0.0
      %1459 = vmatpush1.msra.mxu0 0.0
      %1460 = vmatprep.subr.mxu0 0.0
      %1461 = vmatpush1.msra.mxu0 0.0
      %1462 = vmatprep.subr.mxu0 0.0
      %1463 = vmatpush1.msra.mxu0 0.0
      %1464 = vmatprep.subr.mxu0 0.0
      %1465 = vmatpush1.msra.mxu0 0.0
      %1466 = vmatprep.subr.mxu0 0.0
      %1467 = vmatpush1.msra.mxu0 0.0
      %1468 = vmatprep.subr.mxu0 0.0
      %1469 = vmatpush1.msra.mxu0 0.0
      %1470 = vmatprep.subr.mxu0 0.0
      %1471 = vmatpush1.msra.mxu0 0.0
      %1472 = vmatprep.subr.mxu0 0.0
      %1473 = vmatpush1.msra.mxu0 0.0
      %1474 = vmatprep.subr.mxu0 0.0
      %1475 = vmatpush1.msra.mxu0 0.0
      %1476 = vmatprep.subr.mxu0 0.0
      %1477 = vmatpush1.msra.mxu0 0.0
      %1478 = vmatprep.subr.mxu0 0.0
      %1479 = vmatpush1.msra.mxu0 0.0
      %1480 = vmatprep.subr.mxu0 0.0
      %1481 = vmatpush1.msra.mxu0 0.0
      %1482 = vmatprep.mubr.f32.mxu0 0.0
      %1483 = vmatmul.mubr.f32.gmra.mrb[0].mxu0 %v1371
      %v1484 = vpop.f32.mrb[0].mxu0
      %v1485 = vadd.f32 0.0, %v1484
      %v1486 = vpop.f32.mrb[0].mxu0
      %v1487 = vadd.f32 0.0, %v1486
      %1488 = vmatprep.mubr.f32.mxu0 0.0
      %1489 = vmatmul.mubr.f32.gmra.mrb[0].mxu0 %v1374
      %v1490 = vpop.f32.mrb[0].mxu0
      %v1491 = vadd.f32 0.0, %v1490
      %v1492 = vpop.f32.mrb[0].mxu0
      %v1493 = vadd.f32 0.0, %v1492
      %1494 = vmatprep.mubr.f32.mxu0 0.0
      %1495 = vmatmul.mubr.f32.gmra.mrb[0].mxu0 %v1377
      %v1496 = vpop.f32.mrb[0].mxu0
      %v1497 = vadd.f32 0.0, %v1496
      %v1498 = vpop.f32.mrb[0].mxu0
      %v1499 = vadd.f32 0.0, %v1498
      %1500 = vmatprep.mubr.f32.mxu0 0.0
      %1501 = vmatmul.mubr.f32.gmra.mrb[0].mxu0 %v1380
      %v1502 = vpop.f32.mrb[0].mxu0
      %v1503 = vadd.f32 0.0, %v1502
      %v1504 = vpop.f32.mrb[0].mxu0
      %v1505 = vadd.f32 0.0, %v1504
      %1506 = vmatprep.mubr.f32.mxu0 0.0
      %1507 = vmatmul.mubr.f32.gmra.mrb[0].mxu0 %v1383
      %v1508 = vpop.f32.mrb[0].mxu0
      %v1509 = vadd.f32 0.0, %v1508
      %v1510 = vpop.f32.mrb[0].mxu0
      %v1511 = vadd.f32 0.0, %v1510
      %1512 = vmatprep.mubr.f32.mxu0 0.0
      %1513 = vmatmul.mubr.f32.gmra.mrb[0].mxu0 %v1386
      %v1514 = vpop.f32.mrb[0].mxu0
      %v1515 = vadd.f32 0.0, %v1514
      %v1516 = vpop.f32.mrb[0].mxu0
      %v1517 = vadd.f32 0.0, %v1516
      %1518 = vmatprep.mubr.f32.mxu0 0.0
      %1519 = vmatmul.mubr.f32.gmra.mrb[0].mxu0 %v1389
      %v1520 = vpop.f32.mrb[0].mxu0
      %v1521 = vadd.f32 0.0, %v1520
      %v1522 = vpop.f32.mrb[0].mxu0
      %v1523 = vadd.f32 0.0, %v1522
      %1524 = vmatprep.mubr.f32.mxu0 0.0
      %1525 = vmatmul.mubr.f32.gmra.mrb[0].mxu0 %v1392
      %v1526 = vpop.f32.mrb[0].mxu0
      %v1527 = vadd.f32 0.0, %v1526
      %v1528 = vpop.f32.mrb[0].mxu0
      %v1529 = vadd.f32 0.0, %v1528
      %1530 = vmatprep.mubr.f32.mxu0 0.0
      %1531 = vmatmul.mubr.f32.gmra.mrb[0].mxu0 %v1395
      %v1532 = vpop.f32.mrb[0].mxu0
      %v1533 = vadd.f32 0.0, %v1532
      %v1534 = vpop.f32.mrb[0].mxu0
      %v1535 = vadd.f32 0.0, %v1534
      %1536 = vmatprep.mubr.f32.mxu0 0.0
      %1537 = vmatmul.mubr.f32.gmra.mrb[0].mxu0 %v1398
      %v1538 = vpop.f32.mrb[0].mxu0
      %v1539 = vadd.f32 0.0, %v1538
      %v1540 = vpop.f32.mrb[0].mxu0
      %v1541 = vadd.f32 0.0, %v1540
      %1542 = vmatprep.mubr.f32.mxu0 0.0
      %1543 = vmatmul.mubr.f32.gmra.mrb[0].mxu0 %v1401
      %v1544 = vpop.f32.mrb[0].mxu0
      %v1545 = vadd.f32 0.0, %v1544
      %v1546 = vpop.f32.mrb[0].mxu0
      %v1547 = vadd.f32 0.0, %v1546
      %1548 = vmatprep.mubr.f32.mxu0 0.0
      %1549 = vmatmul.mubr.f32.gmra.mrb[0].mxu0 %v1404
      %v1550 = vpop.f32.mrb[0].mxu0
      %v1551 = vadd.f32 0.0, %v1550
      %v1552 = vpop.f32.mrb[0].mxu0
      %v1553 = vadd.f32 0.0, %v1552
      %1554 = vmatprep.mubr.f32.mxu0 0.0
      %1555 = vmatmul.mubr.f32.gmra.mrb[0].mxu0 %v1407
      %v1556 = vpop.f32.mrb[0].mxu0
      %v1557 = vadd.f32 0.0, %v1556
      %v1558 = vpop.f32.mrb[0].mxu0
      %v1559 = vadd.f32 0.0, %v1558
      %1560 = vmatprep.mubr.f32.mxu0 0.0
      %1561 = vmatmul.mubr.f32.gmra.mrb[0].mxu0 %v1410
      %v1562 = vpop.f32.mrb[0].mxu0
      %v1563 = vadd.f32 0.0, %v1562
      %v1564 = vpop.f32.mrb[0].mxu0
      %v1565 = vadd.f32 0.0, %v1564
      %1566 = vmatprep.mubr.f32.mxu0 0.0
      %1567 = vmatmul.mubr.f32.gmra.mrb[0].mxu0 %v1413
      %v1568 = vpop.f32.mrb[0].mxu0
      %v1569 = vadd.f32 0.0, %v1568
      %v1570 = vpop.f32.mrb[0].mxu0
      %v1571 = vadd.f32 0.0, %v1570
      %1572 = vmatprep.mubr.f32.mxu0 0.0
      %1573 = vmatmul.mubr.f32.gmra.mrb[0].mxu0 %v1416
      %v1574 = vpop.f32.mrb[0].mxu0
      %v1575 = vadd.f32 0.0, %v1574
      %v1576 = vpop.f32.mrb[0].mxu0
      %v1577 = vadd.f32 0.0, %v1576
      %1578 = vdwg.mxu0
      %v1579 = vmul.f32 %v1485, %v1074
      %v1580 = vmul.f32 %v1487, %v1075
      %v1581 = vmul.f32 %v1491, %v1076
      %v1582 = vmul.f32 %v1493, %v1077
      %v1583 = vmul.f32 %v1497, %v1078
      %v1584 = vmul.f32 %v1499, %v1079
      %v1585 = vmul.f32 %v1503, %v1080
      %v1586 = vmul.f32 %v1505, %v1081
      %v1587 = vmul.f32 %v1509, %v1082
      %v1588 = vmul.f32 %v1511, %v1083
      %v1589 = vmul.f32 %v1515, %v1084
      %v1590 = vmul.f32 %v1517, %v1085
      %v1591 = vmul.f32 %v1521, %v1086
      %v1592 = vmul.f32 %v1523, %v1087
      %v1593 = vmul.f32 %v1527, %v1088
      %v1594 = vmul.f32 %v1529, %v1089
      %v1595 = vmul.f32 %v1533, %v1090
      %v1596 = vmul.f32 %v1535, %v1091
      %v1597 = vmul.f32 %v1539, %v1092
      %v1598 = vmul.f32 %v1541, %v1093
      %v1599 = vmul.f32 %v1545, %v1094
      %v1600 = vmul.f32 %v1547, %v1095
      %v1601 = vmul.f32 %v1551, %v1096
      %v1602 = vmul.f32 %v1553, %v1097
      %v1603 = vmul.f32 %v1557, %v1098
      %v1604 = vmul.f32 %v1559, %v1099
      %v1605 = vmul.f32 %v1563, %v1100
      %v1606 = vmul.f32 %v1565, %v1101
      %v1607 = vmul.f32 %v1569, %v1102
      %v1608 = vmul.f32 %v1571, %v1103
      %v1609 = vmul.f32 %v1575, %v1104
      %v1610 = vmul.f32 %v1577, %v1105
      %v1611 = vld [vmem:[%s10] sm:$0xff]
      %v1612 = vld [vmem:[%s10 + $0x8] sm:$0xff]
      %v1613 = vld [vmem:[%s10 + $0x10] sm:$0xff]
      %v1614 = vld [vmem:[%s10 + $0x18] sm:$0xff]
      %v1615 = vld [vmem:[%s10 + $0x20] sm:$0xff]
      %v1616 = vld [vmem:[%s10 + $0x28] sm:$0xff]
      %v1617 = vld [vmem:[%s10 + $0x30] sm:$0xff]
      %v1618 = vld [vmem:[%s10 + $0x38] sm:$0xff]
      %v1619 = vld [vmem:[%s10 + $0x40] sm:$0xff]
      %v1620 = vld [vmem:[%s10 + $0x48] sm:$0xff]
      %v1621 = vld [vmem:[%s10 + $0x50] sm:$0xff]
      %v1622 = vld [vmem:[%s10 + $0x58] sm:$0xff]
      %v1623 = vld [vmem:[%s10 + $0x60] sm:$0xff]
      %v1624 = vld [vmem:[%s10 + $0x68] sm:$0xff]
      %v1625 = vld [vmem:[%s10 + $0x70] sm:$0xff]
      %v1626 = vld [vmem:[%s10 + $0x78] sm:$0xff]
      %v1627 = vld [vmem:[%s10 + $0x80] sm:$0xff]
      %v1628 = vld [vmem:[%s10 + $0x88] sm:$0xff]
      %v1629 = vld [vmem:[%s10 + $0x90] sm:$0xff]
      %v1630 = vld [vmem:[%s10 + $0x98] sm:$0xff]
      %v1631 = vld [vmem:[%s10 + $0xa0] sm:$0xff]
      %v1632 = vld [vmem:[%s10 + $0xa8] sm:$0xff]
      %v1633 = vld [vmem:[%s10 + $0xb0] sm:$0xff]
      %v1634 = vld [vmem:[%s10 + $0xb8] sm:$0xff]
      %v1635 = vld [vmem:[%s10 + $0xc0] sm:$0xff]
      %v1636 = vld [vmem:[%s10 + $0xc8] sm:$0xff]
      %v1637 = vld [vmem:[%s10 + $0xd0] sm:$0xff]
      %v1638 = vld [vmem:[%s10 + $0xd8] sm:$0xff]
      %v1639 = vld [vmem:[%s10 + $0xe0] sm:$0xff]
      %v1640 = vld [vmem:[%s10 + $0xe8] sm:$0xff]
      %v1641 = vld [vmem:[%s10 + $0xf0] sm:$0xff]
      %v1642 = vld [vmem:[%s10 + $0xf8] sm:$0xff]
      %1643 = vmatprep.subr.mxu0 0.0
      %1644 = vmatpush1.msra.mxu0 %v1611
      %1645 = vmatprep.subr.mxu0 0.0
      %1646 = vmatpush1.msra.mxu0 %v1612
      %1647 = vmatprep.subr.mxu0 0.0
      %1648 = vmatpush1.msra.mxu0 %v1613
      %1649 = vmatprep.subr.mxu0 0.0
      %1650 = vmatpush1.msra.mxu0 %v1614
      %1651 = vmatprep.subr.mxu0 0.0
      %1652 = vmatpush1.msra.mxu0 %v1615
      %1653 = vmatprep.subr.mxu0 0.0
      %1654 = vmatpush1.msra.mxu0 %v1616
      %1655 = vmatprep.subr.mxu0 0.0
      %1656 = vmatpush1.msra.mxu0 %v1617
      %1657 = vmatprep.subr.mxu0 0.0
      %1658 = vmatpush1.msra.mxu0 %v1618
      %1659 = vmatprep.subr.mxu0 0.0
      %1660 = vmatpush1.msra.mxu0 %v1619
      %1661 = vmatprep.subr.mxu0 0.0
      %1662 = vmatpush1.msra.mxu0 %v1620
      %1663 = vmatprep.subr.mxu0 0.0
      %1664 = vmatpush1.msra.mxu0 %v1621
      %1665 = vmatprep.subr.mxu0 0.0
      %1666 = vmatpush1.msra.mxu0 %v1622
      %1667 = vmatprep.subr.mxu0 0.0
      %1668 = vmatpush1.msra.mxu0 %v1623
      %1669 = vmatprep.subr.mxu0 0.0
      %1670 = vmatpush1.msra.mxu0 %v1624
      %1671 = vmatprep.subr.mxu0 0.0
      %1672 = vmatpush1.msra.mxu0 %v1625
      %1673 = vmatprep.subr.mxu0 0.0
      %1674 = vmatpush1.msra.mxu0 %v1626
      %1675 = vmatprep.subr.mxu0 0.0
      %1676 = vmatpush1.msra.mxu0 %v1627
      %1677 = vmatprep.subr.mxu0 0.0
      %1678 = vmatpush1.msra.mxu0 %v1628
      %1679 = vmatprep.subr.mxu0 0.0
      %1680 = vmatpush1.msra.mxu0 %v1629
      %1681 = vmatprep.subr.mxu0 0.0
      %1682 = vmatpush1.msra.mxu0 %v1630
      %1683 = vmatprep.subr.mxu0 0.0
      %1684 = vmatpush1.msra.mxu0 %v1631
      %1685 = vmatprep.subr.mxu0 0.0
      %1686 = vmatpush1.msra.mxu0 %v1632
      %1687 = vmatprep.subr.mxu0 0.0
      %1688 = vmatpush1.msra.mxu0 %v1633
      %1689 = vmatprep.subr.mxu0 0.0
      %1690 = vmatpush1.msra.mxu0 %v1634
      %1691 = vmatprep.subr.mxu0 0.0
      %1692 = vmatpush1.msra.mxu0 %v1635
      %1693 = vmatprep.subr.mxu0 0.0
      %1694 = vmatpush1.msra.mxu0 %v1636
      %1695 = vmatprep.subr.mxu0 0.0
      %1696 = vmatpush1.msra.mxu0 %v1637
      %1697 = vmatprep.subr.mxu0 0.0
      %1698 = vmatpush1.msra.mxu0 %v1638
      %1699 = vmatprep.subr.mxu0 0.0
      %1700 = vmatpush1.msra.mxu0 %v1639
      %1701 = vmatprep.subr.mxu0 0.0
      %1702 = vmatpush1.msra.mxu0 %v1640
      %1703 = vmatprep.subr.mxu0 0.0
      %1704 = vmatpush1.msra.mxu0 %v1641
      %1705 = vmatprep.subr.mxu0 0.0
      %1706 = vmatpush1.msra.mxu0 %v1642
      %1707 = vmatprep.mubr.f32.mxu0 %v1580
      %1708 = vmatmul.mubr.f32.gmra.mrb[0].mxu0 %v1579
      %v1709 = vpop.f32.mrb[0].mxu0
      %v1710 = vadd.f32 0.0, %v1709
      %v1711 = vpop.f32.mrb[0].mxu0
      %1712 = vmatprep.mubr.f32.mxu0 %v1582
      %1713 = vmatmul.mubr.f32.gmra.mrb[0].mxu0 %v1581
      %v1714 = vpop.f32.mrb[0].mxu0
      %v1715 = vadd.f32 0.0, %v1714
      %v1716 = vpop.f32.mrb[0].mxu0
      %1717 = vmatprep.mubr.f32.mxu0 %v1584
      %1718 = vmatmul.mubr.f32.gmra.mrb[0].mxu0 %v1583
      %v1719 = vpop.f32.mrb[0].mxu0
      %v1720 = vadd.f32 0.0, %v1719
      %v1721 = vpop.f32.mrb[0].mxu0
      %1722 = vmatprep.mubr.f32.mxu0 %v1586
      %1723 = vmatmul.mubr.f32.gmra.mrb[0].mxu0 %v1585
      %v1724 = vpop.f32.mrb[0].mxu0
      %v1725 = vadd.f32 0.0, %v1724
      %v1726 = vpop.f32.mrb[0].mxu0
      %1727 = vmatprep.mubr.f32.mxu0 %v1588
      %1728 = vmatmul.mubr.f32.gmra.mrb[0].mxu0 %v1587
      %v1729 = vpop.f32.mrb[0].mxu0
      %v1730 = vadd.f32 0.0, %v1729
      %v1731 = vpop.f32.mrb[0].mxu0
      %1732 = vmatprep.mubr.f32.mxu0 %v1590
      %1733 = vmatmul.mubr.f32.gmra.mrb[0].mxu0 %v1589
      %v1734 = vpop.f32.mrb[0].mxu0
      %v1735 = vadd.f32 0.0, %v1734
      %v1736 = vpop.f32.mrb[0].mxu0
      %1737 = vmatprep.mubr.f32.mxu0 %v1592
      %1738 = vmatmul.mubr.f32.gmra.mrb[0].mxu0 %v1591
      %v1739 = vpop.f32.mrb[0].mxu0
      %v1740 = vadd.f32 0.0, %v1739
      %v1741 = vpop.f32.mrb[0].mxu0
      %1742 = vmatprep.mubr.f32.mxu0 %v1594
      %1743 = vmatmul.mubr.f32.gmra.mrb[0].mxu0 %v1593
      %v1744 = vpop.f32.mrb[0].mxu0
      %v1745 = vadd.f32 0.0, %v1744
      %v1746 = vpop.f32.mrb[0].mxu0
      %1747 = vmatprep.mubr.f32.mxu0 %v1596
      %1748 = vmatmul.mubr.f32.gmra.mrb[0].mxu0 %v1595
      %v1749 = vpop.f32.mrb[0].mxu0
      %v1750 = vadd.f32 0.0, %v1749
      %v1751 = vpop.f32.mrb[0].mxu0
      %1752 = vmatprep.mubr.f32.mxu0 %v1598
      %1753 = vmatmul.mubr.f32.gmra.mrb[0].mxu0 %v1597
      %v1754 = vpop.f32.mrb[0].mxu0
      %v1755 = vadd.f32 0.0, %v1754
      %v1756 = vpop.f32.mrb[0].mxu0
      %1757 = vmatprep.mubr.f32.mxu0 %v1600
      %1758 = vmatmul.mubr.f32.gmra.mrb[0].mxu0 %v1599
      %v1759 = vpop.f32.mrb[0].mxu0
      %v1760 = vadd.f32 0.0, %v1759
      %v1761 = vpop.f32.mrb[0].mxu0
      %1762 = vmatprep.mubr.f32.mxu0 %v1602
      %1763 = vmatmul.mubr.f32.gmra.mrb[0].mxu0 %v1601
      %v1764 = vpop.f32.mrb[0].mxu0
      %v1765 = vadd.f32 0.0, %v1764
      %v1766 = vpop.f32.mrb[0].mxu0
      %1767 = vmatprep.mubr.f32.mxu0 %v1604
      %1768 = vmatmul.mubr.f32.gmra.mrb[0].mxu0 %v1603
      %v1769 = vpop.f32.mrb[0].mxu0
      %v1770 = vadd.f32 0.0, %v1769
      %v1771 = vpop.f32.mrb[0].mxu0
      %1772 = vmatprep.mubr.f32.mxu0 %v1606
      %1773 = vmatmul.mubr.f32.gmra.mrb[0].mxu0 %v1605
      %v1774 = vpop.f32.mrb[0].mxu0
      %v1775 = vadd.f32 0.0, %v1774
      %v1776 = vpop.f32.mrb[0].mxu0
      %1777 = vmatprep.mubr.f32.mxu0 %v1608
      %1778 = vmatmul.mubr.f32.gmra.mrb[0].mxu0 %v1607
      %v1779 = vpop.f32.mrb[0].mxu0
      %v1780 = vadd.f32 0.0, %v1779
      %v1781 = vpop.f32.mrb[0].mxu0
      %1782 = vmatprep.mubr.f32.mxu0 %v1610
      %1783 = vmatmul.mubr.f32.gmra.mrb[0].mxu0 %v1609
      %v1784 = vpop.f32.mrb[0].mxu0
      %v1785 = vadd.f32 0.0, %v1784
      %v1786 = vpop.f32.mrb[0].mxu0
      %1787 = vdwg.mxu0
      %v1788 = vld [vmem:[%s464] sm:$0xff]
      %v1789 = vld [vmem:[%s464 + $0x8] sm:$0xff]
      %v1790 = vld [vmem:[%s464 + $0x10] sm:$0xff]
      %v1791 = vld [vmem:[%s464 + $0x18] sm:$0xff]
      %v1792 = vld [vmem:[%s464 + $0x20] sm:$0xff]
      %v1793 = vld [vmem:[%s464 + $0x28] sm:$0xff]
      %v1794 = vld [vmem:[%s464 + $0x30] sm:$0xff]
      %v1795 = vld [vmem:[%s464 + $0x38] sm:$0xff]
      %v1796 = vld [vmem:[%s464 + $0x40] sm:$0xff]
      %v1797 = vld [vmem:[%s464 + $0x48] sm:$0xff]
      %v1798 = vld [vmem:[%s464 + $0x50] sm:$0xff]
      %v1799 = vld [vmem:[%s464 + $0x58] sm:$0xff]
      %v1800 = vld [vmem:[%s464 + $0x60] sm:$0xff]
      %v1801 = vld [vmem:[%s464 + $0x68] sm:$0xff]
      %v1802 = vld [vmem:[%s464 + $0x70] sm:$0xff]
      %v1803 = vld [vmem:[%s464 + $0x78] sm:$0xff]
      %1805 = vset.pattern.permute.xlu0 0
      %1806 = vperm.xlu0 %1805, %v1788
      %v1807 = vpop.permute.xlu0 %1806
      %1810 = vset.pattern.permute.xlu0 0
      %1811 = vperm.xlu0 %1810, %v1789
      %v1812 = vpop.permute.xlu0 %1811
      %1815 = vset.pattern.permute.xlu0 0
      %1816 = vperm.xlu0 %1815, %v1790
      %v1817 = vpop.permute.xlu0 %1816
      %1820 = vset.pattern.permute.xlu0 0
      %1821 = vperm.xlu0 %1820, %v1791
      %v1822 = vpop.permute.xlu0 %1821
      %1825 = vset.pattern.permute.xlu0 0
      %1826 = vperm.xlu0 %1825, %v1792
      %v1827 = vpop.permute.xlu0 %1826
      %1830 = vset.pattern.permute.xlu0 0
      %1831 = vperm.xlu0 %1830, %v1793
      %v1832 = vpop.permute.xlu0 %1831
      %1835 = vset.pattern.permute.xlu0 0
      %1836 = vperm.xlu0 %1835, %v1794
      %v1837 = vpop.permute.xlu0 %1836
      %1840 = vset.pattern.permute.xlu0 0
      %1841 = vperm.xlu0 %1840, %v1795
      %v1842 = vpop.permute.xlu0 %1841
      %1845 = vset.pattern.permute.xlu0 0
      %1846 = vperm.xlu0 %1845, %v1796
      %v1847 = vpop.permute.xlu0 %1846
      %1850 = vset.pattern.permute.xlu0 0
      %1851 = vperm.xlu0 %1850, %v1797
      %v1852 = vpop.permute.xlu0 %1851
      %1855 = vset.pattern.permute.xlu0 0
      %1856 = vperm.xlu0 %1855, %v1798
      %v1857 = vpop.permute.xlu0 %1856
      %1860 = vset.pattern.permute.xlu0 0
      %1861 = vperm.xlu0 %1860, %v1799
      %v1862 = vpop.permute.xlu0 %1861
      %1865 = vset.pattern.permute.xlu0 0
      %1866 = vperm.xlu0 %1865, %v1800
      %v1867 = vpop.permute.xlu0 %1866
      %1870 = vset.pattern.permute.xlu0 0
      %1871 = vperm.xlu0 %1870, %v1801
      %v1872 = vpop.permute.xlu0 %1871
      %1875 = vset.pattern.permute.xlu0 0
      %1876 = vperm.xlu0 %1875, %v1802
      %v1877 = vpop.permute.xlu0 %1876
      %1880 = vset.pattern.permute.xlu0 0
      %1881 = vperm.xlu0 %1880, %v1803
      %v1882 = vpop.permute.xlu0 %1881
      %v1884 = vmul.f32 %v1710, %v1807
      %v1885 = vmul.f32 %v1715, %v1812
      %v1886 = vmul.f32 %v1720, %v1817
      %v1887 = vmul.f32 %v1725, %v1822
      %v1888 = vmul.f32 %v1730, %v1827
      %v1889 = vmul.f32 %v1735, %v1832
      %v1890 = vmul.f32 %v1740, %v1837
      %v1891 = vmul.f32 %v1745, %v1842
      %v1892 = vmul.f32 %v1750, %v1847
      %v1893 = vmul.f32 %v1755, %v1852
      %v1894 = vmul.f32 %v1760, %v1857
      %v1895 = vmul.f32 %v1765, %v1862
      %v1896 = vmul.f32 %v1770, %v1867
      %v1897 = vmul.f32 %v1775, %v1872
      %v1898 = vmul.f32 %v1780, %v1877
      %v1899 = vmul.f32 %v1785, %v1882
      %v1900 = vlaneseq
      %v1901 = vshrl.u32 %v1900, 7
      %v1902 = vadd.s32 %v1901, 8
      %v1903 = vadd.s32 %v1901, 16
      %v1904 = vadd.s32 %v1901, 24
      %v1905 = vadd.s32 %v1901, 32
      %v1906 = vadd.s32 %v1901, 40
      %v1907 = vadd.s32 %v1901, 48
      %v1908 = vadd.s32 %v1901, 56
      %v1909 = vadd.s32 %v1901, 64
      %v1910 = vadd.s32 %v1901, 72
      %v1911 = vadd.s32 %v1901, 80
      %v1912 = vadd.s32 %v1901, 88
      %v1913 = vadd.s32 %v1901, 96
      %v1914 = vadd.s32 %v1901, 104
      %v1915 = vadd.s32 %v1901, 112
      %v1916 = vadd.s32 %v1901, 120
      %v1917 = vld [vmem:[%s459] sm:$0x1]
      %v1918 = vlaneseq
      %v1919 = vshrl.u32 %v1918, 7
      %v1920 = vsub.s32 0, %v1919
      %v1921 = vrot.slane %v1917, %v1920
      %vm1922 = vcmp.eq.s32.totalorder %v1901, %v1921
      %vm1923 = vcmp.eq.s32.totalorder %v1902, %v1921
      %vm1924 = vcmp.eq.s32.totalorder %v1903, %v1921
      %vm1925 = vcmp.eq.s32.totalorder %v1904, %v1921
      %vm1926 = vcmp.eq.s32.totalorder %v1905, %v1921
      %vm1927 = vcmp.eq.s32.totalorder %v1906, %v1921
      %vm1928 = vcmp.eq.s32.totalorder %v1907, %v1921
      %vm1929 = vcmp.eq.s32.totalorder %v1908, %v1921
      %vm1930 = vcmp.eq.s32.totalorder %v1909, %v1921
      %vm1931 = vcmp.eq.s32.totalorder %v1910, %v1921
      %vm1932 = vcmp.eq.s32.totalorder %v1911, %v1921
      %vm1933 = vcmp.eq.s32.totalorder %v1912, %v1921
      %vm1934 = vcmp.eq.s32.totalorder %v1913, %v1921
      %vm1935 = vcmp.eq.s32.totalorder %v1914, %v1921
      %vm1936 = vcmp.eq.s32.totalorder %v1915, %v1921
      %vm1937 = vcmp.eq.s32.totalorder %v1916, %v1921
      %v1938 = vsel %vm1922, 1.0, 0.0
      %v1939 = vsel %vm1923, 1.0, 0.0
      %v1940 = vsel %vm1924, 1.0, 0.0
      %v1941 = vsel %vm1925, 1.0, 0.0
      %v1942 = vsel %vm1926, 1.0, 0.0
      %v1943 = vsel %vm1927, 1.0, 0.0
      %v1944 = vsel %vm1928, 1.0, 0.0
      %v1945 = vsel %vm1929, 1.0, 0.0
      %v1946 = vsel %vm1930, 1.0, 0.0
      %v1947 = vsel %vm1931, 1.0, 0.0
      %v1948 = vsel %vm1932, 1.0, 0.0
      %v1949 = vsel %vm1933, 1.0, 0.0
      %v1950 = vsel %vm1934, 1.0, 0.0
      %v1951 = vsel %vm1935, 1.0, 0.0
      %v1952 = vsel %vm1936, 1.0, 0.0
      %v1953 = vsel %vm1937, 1.0, 0.0
      %v1954 = vld [vmem:[#allocation3] sm:$0xff]
      %v1955 = vld [vmem:[#allocation3 + $0x8] sm:$0xff]
      %v1956 = vld [vmem:[#allocation3 + $0x10] sm:$0xff]
      %v1957 = vld [vmem:[#allocation3 + $0x18] sm:$0xff]
      %v1958 = vld [vmem:[#allocation3 + $0x20] sm:$0xff]
      %v1959 = vld [vmem:[#allocation3 + $0x28] sm:$0xff]
      %v1960 = vld [vmem:[#allocation3 + $0x30] sm:$0xff]
      %v1961 = vld [vmem:[#allocation3 + $0x38] sm:$0xff]
      %v1962 = vld [vmem:[#allocation3 + $0x40] sm:$0xff]
      %v1963 = vld [vmem:[#allocation3 + $0x48] sm:$0xff]
      %v1964 = vld [vmem:[#allocation3 + $0x50] sm:$0xff]
      %v1965 = vld [vmem:[#allocation3 + $0x58] sm:$0xff]
      %v1966 = vld [vmem:[#allocation3 + $0x60] sm:$0xff]
      %v1967 = vld [vmem:[#allocation3 + $0x68] sm:$0xff]
      %v1968 = vld [vmem:[#allocation3 + $0x70] sm:$0xff]
      %v1969 = vld [vmem:[#allocation3 + $0x78] sm:$0xff]
      %1970 = vmatprep.subr.mxu0 0.0
      %1971 = vmatpush1.msra.mxu0 %v1884
      %1972 = vmatprep.subr.mxu0 0.0
      %1973 = vmatpush1.msra.mxu0 %v1885
      %1974 = vmatprep.subr.mxu0 0.0
      %1975 = vmatpush1.msra.mxu0 %v1886
      %1976 = vmatprep.subr.mxu0 0.0
      %1977 = vmatpush1.msra.mxu0 %v1887
      %1978 = vmatprep.subr.mxu0 0.0
      %1979 = vmatpush1.msra.mxu0 %v1888
      %1980 = vmatprep.subr.mxu0 0.0
      %1981 = vmatpush1.msra.mxu0 %v1889
      %1982 = vmatprep.subr.mxu0 0.0
      %1983 = vmatpush1.msra.mxu0 %v1890
      %1984 = vmatprep.subr.mxu0 0.0
      %1985 = vmatpush1.msra.mxu0 %v1891
      %1986 = vmatprep.subr.mxu0 0.0
      %1987 = vmatpush1.msra.mxu0 %v1892
      %1988 = vmatprep.subr.mxu0 0.0
      %1989 = vmatpush1.msra.mxu0 %v1893
      %1990 = vmatprep.subr.mxu0 0.0
      %1991 = vmatpush1.msra.mxu0 %v1894
      %1992 = vmatprep.subr.mxu0 0.0
      %1993 = vmatpush1.msra.mxu0 %v1895
      %1994 = vmatprep.subr.mxu0 0.0
      %1995 = vmatpush1.msra.mxu0 %v1896
      %1996 = vmatprep.subr.mxu0 0.0
      %1997 = vmatpush1.msra.mxu0 %v1897
      %1998 = vmatprep.subr.mxu0 0.0
      %1999 = vmatpush1.msra.mxu0 %v1898
      %2000 = vmatprep.subr.mxu0 0.0
      %2001 = vmatpush1.msra.mxu0 %v1899
      %2002 = vmatprep.subr.mxu0 0.0
      %2003 = vmatpush1.msra.mxu0 0.0
      %2004 = vmatprep.subr.mxu0 0.0
      %2005 = vmatpush1.msra.mxu0 0.0
      %2006 = vmatprep.subr.mxu0 0.0
      %2007 = vmatpush1.msra.mxu0 0.0
      %2008 = vmatprep.subr.mxu0 0.0
      %2009 = vmatpush1.msra.mxu0 0.0
      %2010 = vmatprep.subr.mxu0 0.0
      %2011 = vmatpush1.msra.mxu0 0.0
      %2012 = vmatprep.subr.mxu0 0.0
      %2013 = vmatpush1.msra.mxu0 0.0
      %2014 = vmatprep.subr.mxu0 0.0
      %2015 = vmatpush1.msra.mxu0 0.0
      %2016 = vmatprep.subr.mxu0 0.0
      %2017 = vmatpush1.msra.mxu0 0.0
      %2018 = vmatprep.subr.mxu0 0.0
      %2019 = vmatpush1.msra.mxu0 0.0
      %2020 = vmatprep.subr.mxu0 0.0
      %2021 = vmatpush1.msra.mxu0 0.0
      %2022 = vmatprep.subr.mxu0 0.0
      %2023 = vmatpush1.msra.mxu0 0.0
      %2024 = vmatprep.subr.mxu0 0.0
      %2025 = vmatpush1.msra.mxu0 0.0
      %2026 = vmatprep.subr.mxu0 0.0
      %2027 = vmatpush1.msra.mxu0 0.0
      %2028 = vmatprep.subr.mxu0 0.0
      %2029 = vmatpush1.msra.mxu0 0.0
      %2030 = vmatprep.subr.mxu0 0.0
      %2031 = vmatpush1.msra.mxu0 0.0
      %2032 = vmatprep.subr.mxu0 0.0
      %2033 = vmatpush1.msra.mxu0 0.0
      %2034 = vmatprep.mubr.f32.mxu0 0.0
      %2035 = vmatmul.mubr.f32.gmra.mrb[0].mxu0 %v1938
      %v2036 = vpop.f32.mrb[0].mxu0
      %v2037 = vadd.f32 0.0, %v2036
      %v2038 = vpop.f32.mrb[0].mxu0
      %2039 = vmatprep.mubr.f32.mxu0 0.0
      %2040 = vmatmul.mubr.f32.gmra.mrb[0].mxu0 %v1939
      %v2041 = vpop.f32.mrb[0].mxu0
      %v2042 = vadd.f32 0.0, %v2041
      %v2043 = vpop.f32.mrb[0].mxu0
      %2044 = vmatprep.mubr.f32.mxu0 0.0
      %2045 = vmatmul.mubr.f32.gmra.mrb[0].mxu0 %v1940
      %v2046 = vpop.f32.mrb[0].mxu0
      %v2047 = vadd.f32 0.0, %v2046
      %v2048 = vpop.f32.mrb[0].mxu0
      %2049 = vmatprep.mubr.f32.mxu0 0.0
      %2050 = vmatmul.mubr.f32.gmra.mrb[0].mxu0 %v1941
      %v2051 = vpop.f32.mrb[0].mxu0
      %v2052 = vadd.f32 0.0, %v2051
      %v2053 = vpop.f32.mrb[0].mxu0
      %2054 = vmatprep.mubr.f32.mxu0 0.0
      %2055 = vmatmul.mubr.f32.gmra.mrb[0].mxu0 %v1942
      %v2056 = vpop.f32.mrb[0].mxu0
      %v2057 = vadd.f32 0.0, %v2056
      %v2058 = vpop.f32.mrb[0].mxu0
      %2059 = vmatprep.mubr.f32.mxu0 0.0
      %2060 = vmatmul.mubr.f32.gmra.mrb[0].mxu0 %v1943
      %v2061 = vpop.f32.mrb[0].mxu0
      %v2062 = vadd.f32 0.0, %v2061
      %v2063 = vpop.f32.mrb[0].mxu0
      %2064 = vmatprep.mubr.f32.mxu0 0.0
      %2065 = vmatmul.mubr.f32.gmra.mrb[0].mxu0 %v1944
      %v2066 = vpop.f32.mrb[0].mxu0
      %v2067 = vadd.f32 0.0, %v2066
      %v2068 = vpop.f32.mrb[0].mxu0
      %2069 = vmatprep.mubr.f32.mxu0 0.0
      %2070 = vmatmul.mubr.f32.gmra.mrb[0].mxu0 %v1945
      %v2071 = vpop.f32.mrb[0].mxu0
      %v2072 = vadd.f32 0.0, %v2071
      %v2073 = vpop.f32.mrb[0].mxu0
      %2074 = vmatprep.mubr.f32.mxu0 0.0
      %2075 = vmatmul.mubr.f32.gmra.mrb[0].mxu0 %v1946
      %v2076 = vpop.f32.mrb[0].mxu0
      %v2077 = vadd.f32 0.0, %v2076
      %v2078 = vpop.f32.mrb[0].mxu0
      %2079 = vmatprep.mubr.f32.mxu0 0.0
      %2080 = vmatmul.mubr.f32.gmra.mrb[0].mxu0 %v1947
      %v2081 = vpop.f32.mrb[0].mxu0
      %v2082 = vadd.f32 0.0, %v2081
      %v2083 = vpop.f32.mrb[0].mxu0
      %2084 = vmatprep.mubr.f32.mxu0 0.0
      %2085 = vmatmul.mubr.f32.gmra.mrb[0].mxu0 %v1948
      %v2086 = vpop.f32.mrb[0].mxu0
      %v2087 = vadd.f32 0.0, %v2086
      %v2088 = vpop.f32.mrb[0].mxu0
      %2089 = vmatprep.mubr.f32.mxu0 0.0
      %2090 = vmatmul.mubr.f32.gmra.mrb[0].mxu0 %v1949
      %v2091 = vpop.f32.mrb[0].mxu0
      %v2092 = vadd.f32 0.0, %v2091
      %v2093 = vpop.f32.mrb[0].mxu0
      %2094 = vmatprep.mubr.f32.mxu0 0.0
      %2095 = vmatmul.mubr.f32.gmra.mrb[0].mxu0 %v1950
      %v2096 = vpop.f32.mrb[0].mxu0
      %v2097 = vadd.f32 0.0, %v2096
      %v2098 = vpop.f32.mrb[0].mxu0
      %2099 = vmatprep.mubr.f32.mxu0 0.0
      %2100 = vmatmul.mubr.f32.gmra.mrb[0].mxu0 %v1951
      %v2101 = vpop.f32.mrb[0].mxu0
      %v2102 = vadd.f32 0.0, %v2101
      %v2103 = vpop.f32.mrb[0].mxu0
      %2104 = vmatprep.mubr.f32.mxu0 0.0
      %2105 = vmatmul.mubr.f32.gmra.mrb[0].mxu0 %v1952
      %v2106 = vpop.f32.mrb[0].mxu0
      %v2107 = vadd.f32 0.0, %v2106
      %v2108 = vpop.f32.mrb[0].mxu0
      %2109 = vmatprep.mubr.f32.mxu0 0.0
      %2110 = vmatmul.mubr.f32.gmra.mrb[0].mxu0 %v1953
      %v2111 = vpop.f32.mrb[0].mxu0
      %v2112 = vadd.f32 0.0, %v2111
      %v2113 = vpop.f32.mrb[0].mxu0
      %2114 = vdwg.mxu0
      %v2115 = vadd.f32 %v1954, %v2037
      %v2116 = vadd.f32 %v1955, %v2042
      %v2117 = vadd.f32 %v1956, %v2047
      %v2118 = vadd.f32 %v1957, %v2052
      %v2119 = vadd.f32 %v1958, %v2057
      %v2120 = vadd.f32 %v1959, %v2062
      %v2121 = vadd.f32 %v1960, %v2067
      %v2122 = vadd.f32 %v1961, %v2072
      %v2123 = vadd.f32 %v1962, %v2077
      %v2124 = vadd.f32 %v1963, %v2082
      %v2125 = vadd.f32 %v1964, %v2087
      %v2126 = vadd.f32 %v1965, %v2092
      %v2127 = vadd.f32 %v1966, %v2097
      %v2128 = vadd.f32 %v1967, %v2102
      %v2129 = vadd.f32 %v1968, %v2107
      %v2130 = vadd.f32 %v1969, %v2112
      %2131 = vst.msk [vmem:[#allocation3] sm:$0xff] %vm1369, %v2115
      %2132 = vst.msk [vmem:[#allocation3 + $0x8] sm:$0xff] %vm1369, %v2116
      %2133 = vst.msk [vmem:[#allocation3 + $0x10] sm:$0xff] %vm1369, %v2117
      %2134 = vst.msk [vmem:[#allocation3 + $0x18] sm:$0xff] %vm1369, %v2118
      %2135 = vst.msk [vmem:[#allocation3 + $0x20] sm:$0xff] %vm1369, %v2119
      %2136 = vst.msk [vmem:[#allocation3 + $0x28] sm:$0xff] %vm1369, %v2120
      %2137 = vst.msk [vmem:[#allocation3 + $0x30] sm:$0xff] %vm1369, %v2121
      %2138 = vst.msk [vmem:[#allocation3 + $0x38] sm:$0xff] %vm1369, %v2122
      %2139 = vst.msk [vmem:[#allocation3 + $0x40] sm:$0xff] %vm1369, %v2123
      %2140 = vst.msk [vmem:[#allocation3 + $0x48] sm:$0xff] %vm1369, %v2124
      %2141 = vst.msk [vmem:[#allocation3 + $0x50] sm:$0xff] %vm1369, %v2125
      %2142 = vst.msk [vmem:[#allocation3 + $0x58] sm:$0xff] %vm1369, %v2126
      %2143 = vst.msk [vmem:[#allocation3 + $0x60] sm:$0xff] %vm1369, %v2127
      %2144 = vst.msk [vmem:[#allocation3 + $0x68] sm:$0xff] %vm1369, %v2128
      %2145 = vst.msk [vmem:[#allocation3 + $0x70] sm:$0xff] %vm1369, %v2129
      %2146 = vst.msk [vmem:[#allocation3 + $0x78] sm:$0xff] %vm1369, %v2130
      // Predicated region
      $region103: #{tpu_custom_call.1} parent=59 // pred_check
        %p2147 = pneg %p490
      $region104: #{tpu_custom_call.1} parent=59 // pred_check_branch
        %2149 = sbr.rel (%p2147) target = $region106
      $region105: #{tpu_custom_call.1} parent=59 // pred_region
        %v2150 = vld [vmem:[#allocation2] sm:$0xff]
        %v2151 = vld [vmem:[#allocation2 + $0x8] sm:$0xff]
        %v2152 = vld [vmem:[#allocation2 + $0x10] sm:$0xff]
        %v2153 = vld [vmem:[#allocation2 + $0x18] sm:$0xff]
        %v2154 = vld [vmem:[#allocation2 + $0x20] sm:$0xff]
        %v2155 = vld [vmem:[#allocation2 + $0x28] sm:$0xff]
        %v2156 = vld [vmem:[#allocation2 + $0x30] sm:$0xff]
        %v2157 = vld [vmem:[#allocation2 + $0x38] sm:$0xff]
        %v2158 = vld [vmem:[#allocation2 + $0x40] sm:$0xff]
        %v2159 = vld [vmem:[#allocation2 + $0x48] sm:$0xff]
        %v2160 = vld [vmem:[#allocation2 + $0x50] sm:$0xff]
        %v2161 = vld [vmem:[#allocation2 + $0x58] sm:$0xff]
        %v2162 = vld [vmem:[#allocation2 + $0x60] sm:$0xff]
        %v2163 = vld [vmem:[#allocation2 + $0x68] sm:$0xff]
        %v2164 = vld [vmem:[#allocation2 + $0x70] sm:$0xff]
        %v2165 = vld [vmem:[#allocation2 + $0x78] sm:$0xff]
        %v2166 = vld [vmem:[#allocation3] sm:$0xff]
        %v2167 = vld [vmem:[#allocation3 + $0x8] sm:$0xff]
        %v2168 = vld [vmem:[#allocation3 + $0x10] sm:$0xff]
        %v2169 = vld [vmem:[#allocation3 + $0x18] sm:$0xff]
        %v2170 = vld [vmem:[#allocation3 + $0x20] sm:$0xff]
        %v2171 = vld [vmem:[#allocation3 + $0x28] sm:$0xff]
        %v2172 = vld [vmem:[#allocation3 + $0x30] sm:$0xff]
        %v2173 = vld [vmem:[#allocation3 + $0x38] sm:$0xff]
        %v2174 = vld [vmem:[#allocation3 + $0x40] sm:$0xff]
        %v2175 = vld [vmem:[#allocation3 + $0x48] sm:$0xff]
        %v2176 = vld [vmem:[#allocation3 + $0x50] sm:$0xff]
        %v2177 = vld [vmem:[#allocation3 + $0x58] sm:$0xff]
        %v2178 = vld [vmem:[#allocation3 + $0x60] sm:$0xff]
        %v2179 = vld [vmem:[#allocation3 + $0x68] sm:$0xff]
        %v2180 = vld [vmem:[#allocation3 + $0x70] sm:$0xff]
        %v2181 = vld [vmem:[#allocation3 + $0x78] sm:$0xff]
        %v2182 = vld [vmem:[%s485] sm:$0xff]
        %v2183 = vld [vmem:[%s485 + $0x8] sm:$0xff]
        %v2185 = vsel %vm1369, %v2150, 0
        %v2188 = vsel %vm1369, %v2151, 0
        %v2191 = vsel %vm1369, %v2152, 0
        %v2194 = vsel %vm1369, %v2153, 0
        %v2197 = vsel %vm1369, %v2154, 0
        %v2200 = vsel %vm1369, %v2155, 0
        %v2203 = vsel %vm1369, %v2156, 0
        %v2206 = vsel %vm1369, %v2157, 0
        %v2209 = vsel %vm1369, %v2158, 0
        %v2212 = vsel %vm1369, %v2159, 0
        %v2215 = vsel %vm1369, %v2160, 0
        %v2218 = vsel %vm1369, %v2161, 0
        %v2221 = vsel %vm1369, %v2162, 0
        %v2224 = vsel %vm1369, %v2163, 0
        %v2227 = vsel %vm1369, %v2164, 0
        %v2230 = vsel %vm1369, %v2165, 0
        %2232 = vmatprep.subr.mxu0 0.0
        %2233 = vmatpush1.msra.mxu0 %v2182
        %2234 = vmatprep.subr.mxu0 0.0
        %2235 = vmatpush1.msra.mxu0 %v2183
        %2236 = vmatprep.subr.mxu0 0.0
        %2237 = vmatpush1.msra.mxu0 0.0
        %2238 = vmatprep.subr.mxu0 0.0
        %2239 = vmatpush1.msra.mxu0 0.0
        %2240 = vmatprep.subr.mxu0 0.0
        %2241 = vmatpush1.msra.mxu0 0.0
        %2242 = vmatprep.subr.mxu0 0.0
        %2243 = vmatpush1.msra.mxu0 0.0
        %2244 = vmatprep.subr.mxu0 0.0
        %2245 = vmatpush1.msra.mxu0 0.0
        %2246 = vmatprep.subr.mxu0 0.0
        %2247 = vmatpush1.msra.mxu0 0.0
        %2248 = vmatprep.subr.mxu0 0.0
        %2249 = vmatpush1.msra.mxu0 0.0
        %2250 = vmatprep.subr.mxu0 0.0
        %2251 = vmatpush1.msra.mxu0 0.0
        %2252 = vmatprep.subr.mxu0 0.0
        %2253 = vmatpush1.msra.mxu0 0.0
        %2254 = vmatprep.subr.mxu0 0.0
        %2255 = vmatpush1.msra.mxu0 0.0
        %2256 = vmatprep.subr.mxu0 0.0
        %2257 = vmatpush1.msra.mxu0 0.0
        %2258 = vmatprep.subr.mxu0 0.0
        %2259 = vmatpush1.msra.mxu0 0.0
        %2260 = vmatprep.subr.mxu0 0.0
        %2261 = vmatpush1.msra.mxu0 0.0
        %2262 = vmatprep.subr.mxu0 0.0
        %2263 = vmatpush1.msra.mxu0 0.0
        %2264 = vmatprep.subr.mxu0 0.0
        %2265 = vmatpush1.msra.mxu0 0.0
        %2266 = vmatprep.subr.mxu0 0.0
        %2267 = vmatpush1.msra.mxu0 0.0
        %2268 = vmatprep.subr.mxu0 0.0
        %2269 = vmatpush1.msra.mxu0 0.0
        %2270 = vmatprep.subr.mxu0 0.0
        %2271 = vmatpush1.msra.mxu0 0.0
        %2272 = vmatprep.subr.mxu0 0.0
        %2273 = vmatpush1.msra.mxu0 0.0
        %2274 = vmatprep.subr.mxu0 0.0
        %2275 = vmatpush1.msra.mxu0 0.0
        %2276 = vmatprep.subr.mxu0 0.0
        %2277 = vmatpush1.msra.mxu0 0.0
        %2278 = vmatprep.subr.mxu0 0.0
        %2279 = vmatpush1.msra.mxu0 0.0
        %2280 = vmatprep.subr.mxu0 0.0
        %2281 = vmatpush1.msra.mxu0 0.0
        %2282 = vmatprep.subr.mxu0 0.0
        %2283 = vmatpush1.msra.mxu0 0.0
        %2284 = vmatprep.subr.mxu0 0.0
        %2285 = vmatpush1.msra.mxu0 0.0
        %2286 = vmatprep.subr.mxu0 0.0
        %2287 = vmatpush1.msra.mxu0 0.0
        %2288 = vmatprep.subr.mxu0 0.0
        %2289 = vmatpush1.msra.mxu0 0.0
        %2290 = vmatprep.subr.mxu0 0.0
        %2291 = vmatpush1.msra.mxu0 0.0
        %2292 = vmatprep.subr.mxu0 0.0
        %2293 = vmatpush1.msra.mxu0 0.0
        %2294 = vmatprep.subr.mxu0 0.0
        %2295 = vmatpush1.msra.mxu0 0.0
        %2296 = vmatprep.mubr.f32.mxu0 0.0
        %2297 = vmatmul.mubr.f32.gmra.mrb[0].mxu0 %v2185
        %v2298 = vpop.f32.mrb[0].mxu0
        %v2299 = vadd.f32 0.0, %v2298
        %v2300 = vpop.f32.mrb[0].mxu0
        %2301 = vmatprep.mubr.f32.mxu0 0.0
        %2302 = vmatmul.mubr.f32.gmra.mrb[0].mxu0 %v2188
        %v2303 = vpop.f32.mrb[0].mxu0
        %v2304 = vadd.f32 0.0, %v2303
        %v2305 = vpop.f32.mrb[0].mxu0
        %2306 = vmatprep.mubr.f32.mxu0 0.0
        %2307 = vmatmul.mubr.f32.gmra.mrb[0].mxu0 %v2191
        %v2308 = vpop.f32.mrb[0].mxu0
        %v2309 = vadd.f32 0.0, %v2308
        %v2310 = vpop.f32.mrb[0].mxu0
        %2311 = vmatprep.mubr.f32.mxu0 0.0
        %2312 = vmatmul.mubr.f32.gmra.mrb[0].mxu0 %v2194
        %v2313 = vpop.f32.mrb[0].mxu0
        %v2314 = vadd.f32 0.0, %v2313
        %v2315 = vpop.f32.mrb[0].mxu0
        %2316 = vmatprep.mubr.f32.mxu0 0.0
        %2317 = vmatmul.mubr.f32.gmra.mrb[0].mxu0 %v2197
        %v2318 = vpop.f32.mrb[0].mxu0
        %v2319 = vadd.f32 0.0, %v2318
        %v2320 = vpop.f32.mrb[0].mxu0
        %2321 = vmatprep.mubr.f32.mxu0 0.0
        %2322 = vmatmul.mubr.f32.gmra.mrb[0].mxu0 %v2200
        %v2323 = vpop.f32.mrb[0].mxu0
        %v2324 = vadd.f32 0.0, %v2323
        %v2325 = vpop.f32.mrb[0].mxu0
        %2326 = vmatprep.mubr.f32.mxu0 0.0
        %2327 = vmatmul.mubr.f32.gmra.mrb[0].mxu0 %v2203
        %v2328 = vpop.f32.mrb[0].mxu0
        %v2329 = vadd.f32 0.0, %v2328
        %v2330 = vpop.f32.mrb[0].mxu0
        %2331 = vmatprep.mubr.f32.mxu0 0.0
        %2332 = vmatmul.mubr.f32.gmra.mrb[0].mxu0 %v2206
        %v2333 = vpop.f32.mrb[0].mxu0
        %v2334 = vadd.f32 0.0, %v2333
        %v2335 = vpop.f32.mrb[0].mxu0
        %2336 = vmatprep.mubr.f32.mxu0 0.0
        %2337 = vmatmul.mubr.f32.gmra.mrb[0].mxu0 %v2209
        %v2338 = vpop.f32.mrb[0].mxu0
        %v2339 = vadd.f32 0.0, %v2338
        %v2340 = vpop.f32.mrb[0].mxu0
        %2341 = vmatprep.mubr.f32.mxu0 0.0
        %2342 = vmatmul.mubr.f32.gmra.mrb[0].mxu0 %v2212
        %v2343 = vpop.f32.mrb[0].mxu0
        %v2344 = vadd.f32 0.0, %v2343
        %v2345 = vpop.f32.mrb[0].mxu0
        %2346 = vmatprep.mubr.f32.mxu0 0.0
        %2347 = vmatmul.mubr.f32.gmra.mrb[0].mxu0 %v2215
        %v2348 = vpop.f32.mrb[0].mxu0
        %v2349 = vadd.f32 0.0, %v2348
        %v2350 = vpop.f32.mrb[0].mxu0
        %2351 = vmatprep.mubr.f32.mxu0 0.0
        %2352 = vmatmul.mubr.f32.gmra.mrb[0].mxu0 %v2218
        %v2353 = vpop.f32.mrb[0].mxu0
        %v2354 = vadd.f32 0.0, %v2353
        %v2355 = vpop.f32.mrb[0].mxu0
        %2356 = vmatprep.mubr.f32.mxu0 0.0
        %2357 = vmatmul.mubr.f32.gmra.mrb[0].mxu0 %v2221
        %v2358 = vpop.f32.mrb[0].mxu0
        %v2359 = vadd.f32 0.0, %v2358
        %v2360 = vpop.f32.mrb[0].mxu0
        %2361 = vmatprep.mubr.f32.mxu0 0.0
        %2362 = vmatmul.mubr.f32.gmra.mrb[0].mxu0 %v2224
        %v2363 = vpop.f32.mrb[0].mxu0
        %v2364 = vadd.f32 0.0, %v2363
        %v2365 = vpop.f32.mrb[0].mxu0
        %2366 = vmatprep.mubr.f32.mxu0 0.0
        %2367 = vmatmul.mubr.f32.gmra.mrb[0].mxu0 %v2227
        %v2368 = vpop.f32.mrb[0].mxu0
        %v2369 = vadd.f32 0.0, %v2368
        %v2370 = vpop.f32.mrb[0].mxu0
        %2371 = vmatprep.mubr.f32.mxu0 0.0
        %2372 = vmatmul.mubr.f32.gmra.mrb[0].mxu0 %v2230
        %v2373 = vpop.f32.mrb[0].mxu0
        %v2374 = vadd.f32 0.0, %v2373
        %v2375 = vpop.f32.mrb[0].mxu0
        %2376 = vdwg.mxu0
        %v2377 = vadd.f32 %v2166, %v2299
        %v2378 = vadd.f32 %v2167, %v2304
        %v2379 = vadd.f32 %v2168, %v2309
        %v2380 = vadd.f32 %v2169, %v2314
        %v2381 = vadd.f32 %v2170, %v2319
        %v2382 = vadd.f32 %v2171, %v2324
        %v2383 = vadd.f32 %v2172, %v2329
        %v2384 = vadd.f32 %v2173, %v2334
        %v2385 = vadd.f32 %v2174, %v2339
        %v2386 = vadd.f32 %v2175, %v2344
        %v2387 = vadd.f32 %v2176, %v2349
        %v2388 = vadd.f32 %v2177, %v2354
        %v2389 = vadd.f32 %v2178, %v2359
        %v2390 = vadd.f32 %v2179, %v2364
        %v2391 = vadd.f32 %v2180, %v2369
        %v2392 = vadd.f32 %v2181, %v2374
        %v2393 = vld [vmem:[%s488] sm:$0x1]
        %v2395 = vlaneseq
        %v2396 = vshrl.u32 %v2395, 7
        %v2397 = vsub.s32 0, %v2396
        %v2398 = vrot.slane %v2393, %v2397
        %v2400 = vadd.f32 %v2377, %v2398
        %v2401 = vadd.f32 %v2378, %v2398
        %v2402 = vadd.f32 %v2379, %v2398
        %v2403 = vadd.f32 %v2380, %v2398
        %v2404 = vadd.f32 %v2381, %v2398
        %v2405 = vadd.f32 %v2382, %v2398
        %v2406 = vadd.f32 %v2383, %v2398
        %v2407 = vadd.f32 %v2384, %v2398
        %v2408 = vadd.f32 %v2385, %v2398
        %v2409 = vadd.f32 %v2386, %v2398
        %v2410 = vadd.f32 %v2387, %v2398
        %v2411 = vadd.f32 %v2388, %v2398
        %v2412 = vadd.f32 %v2389, %v2398
        %v2413 = vadd.f32 %v2390, %v2398
        %v2414 = vadd.f32 %v2391, %v2398
        %v2415 = vadd.f32 %v2392, %v2398
        %v2416 = vmax.f32 %v2400, 0.0
        %v2417 = vmax.f32 %v2401, 0.0
        %v2418 = vmax.f32 %v2402, 0.0
        %v2419 = vmax.f32 %v2403, 0.0
        %v2420 = vmax.f32 %v2404, 0.0
        %v2421 = vmax.f32 %v2405, 0.0
        %v2422 = vmax.f32 %v2406, 0.0
        %v2423 = vmax.f32 %v2407, 0.0
        %v2424 = vmax.f32 %v2408, 0.0
        %v2425 = vmax.f32 %v2409, 0.0
        %v2426 = vmax.f32 %v2410, 0.0
        %v2427 = vmax.f32 %v2411, 0.0
        %v2428 = vmax.f32 %v2412, 0.0
        %v2429 = vmax.f32 %v2413, 0.0
        %v2430 = vmax.f32 %v2414, 0.0
        %v2431 = vmax.f32 %v2415, 0.0
        %2432 = vst.msk [vmem:[#allocation2] sm:$0xff] %vm1369, %v2416
        %2433 = vst.msk [vmem:[#allocation2 + $0x8] sm:$0xff] %vm1369, %v2417
        %2434 = vst.msk [vmem:[#allocation2 + $0x10] sm:$0xff] %vm1369, %v2418
        %2435 = vst.msk [vmem:[#allocation2 + $0x18] sm:$0xff] %vm1369, %v2419
        %2436 = vst.msk [vmem:[#allocation2 + $0x20] sm:$0xff] %vm1369, %v2420
        %2437 = vst.msk [vmem:[#allocation2 + $0x28] sm:$0xff] %vm1369, %v2421
        %2438 = vst.msk [vmem:[#allocation2 + $0x30] sm:$0xff] %vm1369, %v2422
        %2439 = vst.msk [vmem:[#allocation2 + $0x38] sm:$0xff] %vm1369, %v2423
        %2440 = vst.msk [vmem:[#allocation2 + $0x40] sm:$0xff] %vm1369, %v2424
        %2441 = vst.msk [vmem:[#allocation2 + $0x48] sm:$0xff] %vm1369, %v2425
        %2442 = vst.msk [vmem:[#allocation2 + $0x50] sm:$0xff] %vm1369, %v2426
        %2443 = vst.msk [vmem:[#allocation2 + $0x58] sm:$0xff] %vm1369, %v2427
        %2444 = vst.msk [vmem:[#allocation2 + $0x60] sm:$0xff] %vm1369, %v2428
        %2445 = vst.msk [vmem:[#allocation2 + $0x68] sm:$0xff] %vm1369, %v2429
        %2446 = vst.msk [vmem:[#allocation2 + $0x70] sm:$0xff] %vm1369, %v2430
        %2447 = vst.msk [vmem:[#allocation2 + $0x78] sm:$0xff] %vm1369, %v2431
        %p2448 = scmp.eq.s32.totalorder %s26, 2
        // Predicated region
        $region107: #{tpu_custom_call.1} parent=105 // pred_check
          %p2449 = pneg %p2448
        $region108: #{tpu_custom_call.1} parent=105 // pred_check_branch
          %2451 = sbr.rel (%p2449) target = $region110
        $region109: #{tpu_custom_call.1} parent=105 // pred_region
          %2452 = vst.msk [vmem:[%s11] sm:$0xff] %vm1369, %v2416
          %2453 = vst.msk [vmem:[%s11 + $0x8] sm:$0xff] %vm1369, %v2417
          %2454 = vst.msk [vmem:[%s11 + $0x10] sm:$0xff] %vm1369, %v2418
          %2455 = vst.msk [vmem:[%s11 + $0x18] sm:$0xff] %vm1369, %v2419
          %2456 = vst.msk [vmem:[%s11 + $0x20] sm:$0xff] %vm1369, %v2420
          %2457 = vst.msk [vmem:[%s11 + $0x28] sm:$0xff] %vm1369, %v2421
          %2458 = vst.msk [vmem:[%s11 + $0x30] sm:$0xff] %vm1369, %v2422
          %2459 = vst.msk [vmem:[%s11 + $0x38] sm:$0xff] %vm1369, %v2423
          %2460 = vst.msk [vmem:[%s11 + $0x40] sm:$0xff] %vm1369, %v2424
          %2461 = vst.msk [vmem:[%s11 + $0x48] sm:$0xff] %vm1369, %v2425
          %2462 = vst.msk [vmem:[%s11 + $0x50] sm:$0xff] %vm1369, %v2426
          %2463 = vst.msk [vmem:[%s11 + $0x58] sm:$0xff] %vm1369, %v2427
          %2464 = vst.msk [vmem:[%s11 + $0x60] sm:$0xff] %vm1369, %v2428
          %2465 = vst.msk [vmem:[%s11 + $0x68] sm:$0xff] %vm1369, %v2429
          %2466 = vst.msk [vmem:[%s11 + $0x70] sm:$0xff] %vm1369, %v2430
          %2467 = vst.msk [vmem:[%s11 + $0x78] sm:$0xff] %vm1369, %v2431
        $region110: #{tpu_custom_call.1} parent=105 // pred_fallthru
          _
      $region106: #{tpu_custom_call.1} parent=59 // pred_fallthru
        _
      // Predicated region
      $region111: #{tpu_custom_call.1} parent=59 // pred_check
        %p2468 = pneg %p297
      $region112: #{tpu_custom_call.1} parent=59 // pred_check_branch
        %2470 = sbr.rel (%p2468) target = $region114
      $region113: #{tpu_custom_call.1} parent=59 // pred_region
        _
      $region114: #{tpu_custom_call.1} parent=59 // pred_fallthru
        _
      // Predicated region
      $region115: #{tpu_custom_call.1} parent=59 // pred_check
        %p2471 = pneg %p297
      $region116: #{tpu_custom_call.1} parent=59 // pred_check_branch
        %2473 = sbr.rel (%p2471) target = $region118
      $region117: #{tpu_custom_call.1} parent=59 // pred_region
        _
      $region118: #{tpu_custom_call.1} parent=59 // pred_fallthru
        _
    $region60: #{tpu_custom_call.1} parent=5 // pred_fallthru
      _
    %p2474 = scmp.le.s32.totalorder 2, %s17
    // Predicated region
    $region119: #{tpu_custom_call.1} parent=5 // pred_check
      %p2475 = pneg %p2474
    $region120: #{tpu_custom_call.1} parent=5 // pred_check_branch
      %2477 = sbr.rel (%p2475) target = $region122
    $region121: #{tpu_custom_call.1} parent=5 // pred_region
      %s2478 = ssub.s32 %s17, 2
    $region122: #{tpu_custom_call.1} parent=5 // pred_fallthru
      _
  $region6: #{tpu_custom_call.1} parent=0 // loop_footer
    %s21 = sadd.s32 1, %s17
  $region7: #{tpu_custom_call.1} parent=0 // loop_footer_branch
    %16 = sbr.rel target = $region3
  $region8: #{tpu_custom_call.1} parent=0 // loop_exit
    _
  %2479 = vsyncmov [#allocation4]
  %s2480 = vpop.sfrf %2479
  %p2481 = scmp.eq.s32.totalorder %s2480, 0
  %p2482 = pneg %p2481
  %2484 = shalt.err (%p2482)

</llo_original>
